<compile_context>
chip_gen: v7x
topology: tpu7x:2x2x1
jax: 0.10.0
libtpu: 0.0.40
codegen_flags: <defaults>
</compile_context>

<pallas_src>
import functools

import numpy as np

import jax
import jax.numpy as jnp
from jax.experimental import pallas as pl
from jax.experimental.pallas import tpu as pltpu


# ----------------------------- Pallas kernel -------------------------------


def _make_decoder_kernel(n_mlp, pad_c, pad_f, pad_h, pad_c2):
    """Fused kernel: MLP trunk + packed heads + E·E^T/sigmoid/mask + softmax."""
    yoff_f = pad_c                 # F segment offset inside the packed head y
    yoff_h = pad_c + pad_f         # h segment offset inside y
    off_c = pad_f                  # C segment offset inside the output slab
    off_h = pad_f + pad_c2         # h segment offset inside the output slab

    def kernel(*refs):
        x_ref = refs[0]
        trunk = refs[1:1 + 2 * n_mlp]
        heads_w_ref, heads_b_ref, a1_ref, a2_ref, s_ref, dm_ref = refs[1 + 2 * n_mlp:-1]
        out_ref = refs[-1]

        # ---- common_net: Linear (+ ReLU between layers), f32 accumulation ----
        h = x_ref[...]
        for i in range(n_mlp):
            w = trunk[2 * i][...]
            b = trunk[2 * i + 1][...]
            h = jnp.dot(h.astype(w.dtype), w,
                        preferred_element_type=jnp.float32) + b
            if i < n_mlp - 1:
                h = jnp.maximum(h, 0.0)

        # ---- all three heads [C | F | h] as ONE lane-dense MXU matmul ----
        wH = heads_w_ref[...]
        y = jnp.dot(h.astype(wH.dtype), wH,
                    preferred_element_type=jnp.float32) + heads_b_ref[...]

        # ---- F head: aligned copy (pad lanes already zero from the weights) ----
        out_ref[:, 0:pad_f] = y[:, yoff_f:yoff_f + pad_f]

        # ---- edges = sigmoid(E E^T), forced unit diagonal ----
        # edges_flat[b, k*N+l] = sum_d E[b,k,d]*E[b,l,d] computed with constant
        # expansion matrices (no 3-D reshape, no scratch, no masked stores):
        #   X1 = c @ A1  (lane q*E+d holds E[b,k,d]) ,  X2 = c @ A2 (E[b,l,d])
        #   edges_flat = (X1 * X2) @ S  (S sums each E-block)
        c_emb = y[:, 0:pad_c]
        x1 = jnp.dot(c_emb, a1_ref[...], preferred_element_type=jnp.float32)
        x2 = jnp.dot(c_emb, a2_ref[...], preferred_element_type=jnp.float32)
        edges = jnp.dot(x1 * x2, s_ref[...], preferred_element_type=jnp.float32)
        sig = jax.nn.sigmoid(edges)
        dm = dm_ref[...]                       # (1, pad_c2) constant diag mask
        out_ref[:, off_c:off_c + pad_c2] = sig * (1.0 - dm) + dm

        # ---- h head: softmax over N_max (pad lanes biased to -1e30 -> exp=0) ----
        hl = y[:, yoff_h:yoff_h + pad_h]
        m = jnp.max(hl, axis=-1, keepdims=True)
        p = jnp.exp(hl - m)
        denom = jnp.sum(p, axis=-1, keepdims=True)
        out_ref[:, off_h:off_h + pad_h] = p * pl.reciprocal(denom, approx=True)

    return kernel


# --------------------------- Parameter packing ------------------------------


def prepare_decoder_params(params, *, n_max, nodes_channels, edge_channels,
                           weights_dtype=jnp.bfloat16, lane_pad=128):
    """One-time packing / padding / casting of DecoderMLP parameters.

    lane_pad=128 is correct on all TPU generations; 256 feeds the v6e/v7x MXU
    slightly better for large layers.
    """
    def rup(v):
        return ((v + lane_pad - 1) // lane_pad) * lane_pad

    f_out = n_max * nodes_channels
    c_out = n_max * edge_channels

    # --- trunk: zero-pad each layer's output dim (and next layer's input) ---
    trunk = []
    in_dim = params["mlp"][0][0].shape[0]
    for (w, b) in params["mlp"]:
        r, c = w.shape
        out_pad = rup(c)
        w_p = jnp.zeros((in_dim, out_pad), jnp.float32).at[:r, :c].set(w)
        b_p = jnp.zeros((1, out_pad), jnp.float32).at[:, :c].set(b)
        trunk.append((w_p.astype(weights_dtype), b_p))
        in_dim = out_pad
    common_pad = in_dim

    pad_c, pad_f, pad_h = rup(c_out), rup(f_out), rup(n_max)
    head_w = pad_c + pad_f + pad_h

    (wf, bf), (wc, bc), (wh, bh) = params["F"], params["C"], params["h"]
    w_heads = jnp.zeros((common_pad, head_w), jnp.float32)
    w_heads = w_heads.at[:wc.shape[0], 0:c_out].set(wc)
    w_heads = w_heads.at[:wf.shape[0], pad_c:pad_c + f_out].set(wf)
    w_heads = w_heads.at[:wh.shape[0], pad_c + pad_f:pad_c + pad_f + n_max].set(wh)
    b_heads = jnp.zeros((1, head_w), jnp.float32)
    b_heads = b_heads.at[:, 0:c_out].set(bc)
    b_heads = b_heads.at[:, pad_c:pad_c + f_out].set(bf)
    # -1e30 in the h-segment pad lanes neutralises them under the in-kernel softmax
    b_heads = b_heads.at[:, pad_c + pad_f:pad_c + pad_f + pad_h].set(-1e30)
    b_heads = b_heads.at[:, pad_c + pad_f:pad_c + pad_f + n_max].set(bh)
    w_heads = w_heads.astype(weights_dtype)

    # --- constant expansion matrices for the E·E^T product (k-major pairs) ---
    w_mid = rup(n_max * n_max * edge_channels)
    pad_c2 = rup(n_max * n_max)
    E = edge_channels
    a1 = np.zeros((pad_c, w_mid), np.float32)
    a2 = np.zeros((pad_c, w_mid), np.float32)
    s = np.zeros((w_mid, pad_c2), np.float32)
    dm = np.zeros((1, pad_c2), np.float32)
    eye = np.eye(E, dtype=np.float32)
    for k in range(n_max):
        for l in range(n_max):
            q = k * n_max + l
            a1[k * E:(k + 1) * E, q * E:(q + 1) * E] = eye
            a2[l * E:(l + 1) * E, q * E:(q + 1) * E] = eye
            s[q * E:(q + 1) * E, q] = 1.0
            if k == l:
                dm[0, q] = 1.0

    arrays = {
        "trunk": trunk,
        "w_heads": w_heads,
        "b_heads": b_heads,
        "A1": jnp.asarray(a1),
        "A2": jnp.asarray(a2),
        "S": jnp.asarray(s),
        "diag": jnp.asarray(dm),
    }
    meta = dict(n_mlp=len(trunk), n_max=n_max, nodes_channels=nodes_channels,
                edge_channels=edge_channels, f_out=f_out, c_out=c_out,
                pad_c=pad_c, pad_f=pad_f, pad_h=pad_h, pad_c2=pad_c2,
                w_mid=w_mid, head_w=head_w, common_pad=common_pad,
                out_w=pad_f + pad_c2 + pad_h)
    return arrays, meta


# ------------------------------ Wrapper -------------------------------------


def _vmem_capacity_bytes():
    try:
        return int(pltpu.get_tpu_info().vmem_capacity_bytes)
    except Exception:
        return 64 * 1024 * 1024   # v7x per-core VMEM (smallest generation)


def _const_bytes(arrays):
    return sum(int(leaf.size) * leaf.dtype.itemsize
               for leaf in jax.tree_util.tree_leaves(arrays))


def _pick_batch_tile(batch, row_bytes, const_bytes, budget):
    for tb in (1024, 512, 256, 128, 64, 32, 16, 8):
        if batch % tb == 0 and const_bytes + tb * row_bytes <= budget:
            return tb
    return batch   # small / odd batch: single full-batch block


def decoder_mlp_forward(x, packed, meta):
    batch, c_in = x.shape
    n_mlp = meta["n_mlp"]
    n_max = meta["n_max"]
    out_w = meta["out_w"]

    budget = int(0.7 * _vmem_capacity_bytes())
    const_bytes = _const_bytes(packed)
    # Rough per-batch-row f32 footprint: double-buffered x + output slab,
    # packed head activation, the edge-product intermediates and temporaries.
    row_bytes = 4 * (2 * c_in + 2 * out_w + meta["head_w"] + 3 * meta["w_mid"]
                     + 2 * meta["common_pad"] + 2 * meta["pad_c2"])
    tb = _pick_batch_tile(batch, row_bytes, const_bytes, budget)
    grid = (batch // tb,)

    # Constants (weights/biases/expansion matrices) live whole-array in VMEM:
    # single-buffered, DMA'd once, never re-fetched across grid steps.
    const_spec = pl.BlockSpec(memory_space=pltpu.MemorySpace.VMEM)

    flat_inputs = [x]
    in_specs = [pl.BlockSpec((tb, c_in), lambda b: (b, 0))]
    for w, b in packed["trunk"]:
        flat_inputs += [w, b]
        in_specs += [const_spec, const_spec]
    flat_inputs += [packed["w_heads"], packed["b_heads"],
                    packed["A1"], packed["A2"], packed["S"], packed["diag"]]
    in_specs += [const_spec] * 6

    kernel = _make_decoder_kernel(n_mlp, meta["pad_c"], meta["pad_f"],
                                  meta["pad_h"], meta["pad_c2"])

    out = pl.pallas_call(
        kernel,
        out_shape=jax.ShapeDtypeStruct((batch, out_w), jnp.float32),
        grid=grid,
        in_specs=in_specs,
        out_specs=pl.BlockSpec((tb, out_w), lambda b: (b, 0)),
        compiler_params=pltpu.CompilerParams(
            dimension_semantics=("parallel",),
            vmem_limit_bytes=budget,
        ),
    )(*flat_inputs)

    # Glue slicing / unflattening in plain JAX (kernel stores stay lane-dense).
    pad_f, pad_c2 = meta["pad_f"], meta["pad_c2"]
    f_batch = out[:, :meta["f_out"]].reshape(batch, n_max, meta["nodes_channels"])
    c_batch = out[:, pad_f:pad_f + n_max * n_max].reshape(batch, n_max, n_max)
    h_batch = out[:, pad_f + pad_c2:pad_f + pad_c2 + n_max]
    return f_batch, c_batch, h_batch


# --------------------------- Parameter setup -------------------------------


def init_params(key, embedding_channels, depth, n_max, nodes_channels, edge_channels):
    channel_list = [int(2 ** (l / 2) * embedding_channels) for l in range(depth + 2)]
    common_channels = channel_list[-1]

    def linear(key, c_in, c_out):
        kw, kb = jax.random.split(key)
        scale = 1.0 / jnp.sqrt(jnp.float32(c_in))
        w = jax.random.normal(kw, (c_in, c_out), jnp.float32) * scale
        b = jax.random.normal(kb, (1, c_out), jnp.float32) * scale
        return w, b

    n_mlp = depth + 1
    keys = jax.random.split(key, n_mlp + 3)
    mlp = [linear(keys[i], channel_list[i], channel_list[i + 1]) for i in range(n_mlp)]
    f_lin = linear(keys[n_mlp + 0], common_channels, n_max * nodes_channels)
    c_lin = linear(keys[n_mlp + 1], common_channels, n_max * edge_channels)
    h_lin = linear(keys[n_mlp + 2], common_channels, n_max)
    return {"mlp": mlp, "F": f_lin, "C": c_lin, "h": h_lin}


# --------------------------- Pure-JAX reference -----------------------------


def reference_forward(x, params, *, n_max, nodes_channels, edge_channels):
    batch = x.shape[0]
    h = x
    n_mlp = len(params["mlp"])
    for i, (w, b) in enumerate(params["mlp"]):
        h = h @ w + b
        if i < n_mlp - 1:
            h = jnp.maximum(h, 0.0)
    f = (h @ params["F"][0] + params["F"][1]).reshape(batch, n_max, nodes_channels)
    e = (h @ params["C"][0] + params["C"][1]).reshape(batch, n_max, edge_channels)
    edges = jnp.einsum("bkd,bld->bkl", e, e)
    c = jax.nn.sigmoid(edges)
    eye = jnp.eye(n_max, dtype=jnp.float32)[None]
    c = c * (1.0 - eye) + eye
    hl = h @ params["h"][0] + params["h"][1]
    return f, c, jax.nn.softmax(hl, axis=1)


# --------------------------------- Main -------------------------------------


if __name__ == "__main__":
    batch = 2
    embedding_channels = 32
    depth = 2
    N_max = 8
    nodes_channels = 4
    edge_embedding_channels = 16

    key = jax.random.PRNGKey(0)
    k_x, k_p = jax.random.split(key)
    x = jax.random.normal(k_x, (batch, embedding_channels), jnp.float32)
    params = init_params(
        k_p, embedding_channels, depth, N_max, nodes_channels, edge_embedding_channels
    )

    F_ref, C_ref, h_ref = reference_forward(
        x, params,
        n_max=N_max, nodes_channels=nodes_channels,
        edge_channels=edge_embedding_channels,
    )

    # --- f32-weight path: tight comparison against the f32 reference ---
    packed32, meta32 = prepare_decoder_params(
        params, n_max=N_max, nodes_channels=nodes_channels,
        edge_channels=edge_embedding_channels, weights_dtype=jnp.float32)
    fwd32 = jax.jit(functools.partial(decoder_mlp_forward, meta=meta32))
    F_b, C_b, h_b = jax.block_until_ready(fwd32(x, packed32))
    assert F_b.shape == (batch, N_max, nodes_channels)
    assert C_b.shape == (batch, N_max, N_max)
    assert h_b.shape == (batch, N_max)
    assert jnp.allclose(F_b, F_ref, rtol=1e-4, atol=1e-4)
    assert jnp.allclose(C_b, C_ref, rtol=1e-4, atol=1e-4)
    # h uses the approximate EUP reciprocal for the softmax denominator.
    assert jnp.allclose(h_b, h_ref, rtol=2e-2, atol=2e-3)

    # --- bf16-weight path (MXU-native, the prepare() default), f32 accum ---
    packed16, meta16 = prepare_decoder_params(
        params, n_max=N_max, nodes_channels=nodes_channels,
        edge_channels=edge_embedding_channels)   # weights_dtype=bfloat16
    fwd16 = jax.jit(functools.partial(decoder_mlp_forward, meta=meta16))
    F_h, C_h, h_h = jax.block_until_ready(fwd16(x, packed16))
    assert jnp.allclose(F_h, F_ref, rtol=1e-1, atol=1e-1)
    assert jnp.allclose(C_h, C_ref, rtol=1e-1, atol=1e-1)
    assert jnp.allclose(h_h, h_ref, rtol=1e-1, atol=1e-1)

    print("KERNEL_OK")
</pallas_src>

<mosaic_0001>
module attributes {stable_mosaic.version = 11 : i64} {
  func.func @kernel(%arg0: i32, %arg1: memref<2x32xf32, #tpu.memory_space<vmem>>, %arg2: memref<32x128xf32, #tpu.memory_space<vmem>>, %arg3: memref<1x128xf32, #tpu.memory_space<vmem>>, %arg4: memref<128x128xf32, #tpu.memory_space<vmem>>, %arg5: memref<1x128xf32, #tpu.memory_space<vmem>>, %arg6: memref<128x128xf32, #tpu.memory_space<vmem>>, %arg7: memref<1x128xf32, #tpu.memory_space<vmem>>, %arg8: memref<128x384xf32, #tpu.memory_space<vmem>>, %arg9: memref<1x384xf32, #tpu.memory_space<vmem>>, %arg10: memref<128x1024xf32, #tpu.memory_space<vmem>>, %arg11: memref<128x1024xf32, #tpu.memory_space<vmem>>, %arg12: memref<1024x128xf32, #tpu.memory_space<vmem>>, %arg13: memref<1x128xf32, #tpu.memory_space<vmem>>, %arg14: memref<2x384xf32, #tpu.memory_space<vmem>>) attributes {dimension_semantics = [#tpu.dimension_semantics<parallel>], iteration_bounds = array<i64: 1>, scalar_prefetch = 0 : i64, scratch_operands = 0 : i64, tpu.core_type = #tpu.core_type<tc>, window_params = [{transform_indices = @transform_0, window_bounds = array<i64: 2, 32>}, {pipeline_mode = #tpu.pipeline_mode<synchronous>, transform_indices = @transform_1, window_bounds = array<i64: 32, 128>}, {pipeline_mode = #tpu.pipeline_mode<synchronous>, transform_indices = @transform_2, window_bounds = array<i64: 1, 128>}, {pipeline_mode = #tpu.pipeline_mode<synchronous>, transform_indices = @transform_3, window_bounds = array<i64: 128, 128>}, {pipeline_mode = #tpu.pipeline_mode<synchronous>, transform_indices = @transform_4, window_bounds = array<i64: 1, 128>}, {pipeline_mode = #tpu.pipeline_mode<synchronous>, transform_indices = @transform_5, window_bounds = array<i64: 128, 128>}, {pipeline_mode = #tpu.pipeline_mode<synchronous>, transform_indices = @transform_6, window_bounds = array<i64: 1, 128>}, {pipeline_mode = #tpu.pipeline_mode<synchronous>, transform_indices = @transform_7, window_bounds = array<i64: 128, 384>}, {pipeline_mode = #tpu.pipeline_mode<synchronous>, transform_indices = @transform_8, window_bounds = array<i64: 1, 384>}, {pipeline_mode = #tpu.pipeline_mode<synchronous>, transform_indices = @transform_9, window_bounds = array<i64: 128, 1024>}, {pipeline_mode = #tpu.pipeline_mode<synchronous>, transform_indices = @transform_10, window_bounds = array<i64: 128, 1024>}, {pipeline_mode = #tpu.pipeline_mode<synchronous>, transform_indices = @transform_11, window_bounds = array<i64: 1024, 128>}, {pipeline_mode = #tpu.pipeline_mode<synchronous>, transform_indices = @transform_12, window_bounds = array<i64: 1, 128>}, {transform_indices = @transform_13, window_bounds = array<i64: 2, 384>}]} {
    %c0 = arith.constant 0 : index
    %c0_0 = arith.constant 0 : index
    %0 = vector.load %arg1[%c0, %c0_0] : memref<2x32xf32, #tpu.memory_space<vmem>>, vector<2x32xf32>
    %c0_1 = arith.constant 0 : index
    %c0_2 = arith.constant 0 : index
    %1 = vector.load %arg2[%c0_1, %c0_2] : memref<32x128xf32, #tpu.memory_space<vmem>>, vector<32x128xf32>
    %c0_3 = arith.constant 0 : index
    %c0_4 = arith.constant 0 : index
    %2 = vector.load %arg3[%c0_3, %c0_4] : memref<1x128xf32, #tpu.memory_space<vmem>>, vector<1x128xf32>
    %cst = arith.constant dense<0.000000e+00> : vector<2x128xf32>
    %3 = tpu.matmul %0, %1, %cst {dimension_numbers = #tpu.dot_dimension_numbers<[1], [0], [0], [1], [0, 0, 1, 1], [], []>} : vector<2x32xf32>, vector<32x128xf32>, vector<2x128xf32> -> vector<2x128xf32>
    %4 = vector.broadcast %2 : vector<1x128xf32> to vector<2x128xf32>
    %5 = arith.addf %3, %4 : vector<2x128xf32>
    %cst_5 = arith.constant 0.000000e+00 : f32
    %6 = vector.broadcast %cst_5 : f32 to vector<2x128xf32>
    %7 = arith.maximumf %5, %6 : vector<2x128xf32>
    %c0_6 = arith.constant 0 : index
    %c0_7 = arith.constant 0 : index
    %8 = vector.load %arg4[%c0_6, %c0_7] : memref<128x128xf32, #tpu.memory_space<vmem>>, vector<128x128xf32>
    %c0_8 = arith.constant 0 : index
    %c0_9 = arith.constant 0 : index
    %9 = vector.load %arg5[%c0_8, %c0_9] : memref<1x128xf32, #tpu.memory_space<vmem>>, vector<1x128xf32>
    %cst_10 = arith.constant dense<0.000000e+00> : vector<2x128xf32>
    %10 = tpu.matmul %7, %8, %cst_10 {dimension_numbers = #tpu.dot_dimension_numbers<[1], [0], [0], [1], [0, 0, 1, 1], [], []>} : vector<2x128xf32>, vector<128x128xf32>, vector<2x128xf32> -> vector<2x128xf32>
    %11 = vector.broadcast %9 : vector<1x128xf32> to vector<2x128xf32>
    %12 = arith.addf %10, %11 : vector<2x128xf32>
    %cst_11 = arith.constant 0.000000e+00 : f32
    %13 = vector.broadcast %cst_11 : f32 to vector<2x128xf32>
    %14 = arith.maximumf %12, %13 : vector<2x128xf32>
    %c0_12 = arith.constant 0 : index
    %c0_13 = arith.constant 0 : index
    %15 = vector.load %arg6[%c0_12, %c0_13] : memref<128x128xf32, #tpu.memory_space<vmem>>, vector<128x128xf32>
    %c0_14 = arith.constant 0 : index
    %c0_15 = arith.constant 0 : index
    %16 = vector.load %arg7[%c0_14, %c0_15] : memref<1x128xf32, #tpu.memory_space<vmem>>, vector<1x128xf32>
    %cst_16 = arith.constant dense<0.000000e+00> : vector<2x128xf32>
    %17 = tpu.matmul %14, %15, %cst_16 {dimension_numbers = #tpu.dot_dimension_numbers<[1], [0], [0], [1], [0, 0, 1, 1], [], []>} : vector<2x128xf32>, vector<128x128xf32>, vector<2x128xf32> -> vector<2x128xf32>
    %18 = vector.broadcast %16 : vector<1x128xf32> to vector<2x128xf32>
    %19 = arith.addf %17, %18 : vector<2x128xf32>
    %c0_17 = arith.constant 0 : index
    %c0_18 = arith.constant 0 : index
    %20 = vector.load %arg8[%c0_17, %c0_18] : memref<128x384xf32, #tpu.memory_space<vmem>>, vector<128x384xf32>
    %cst_19 = arith.constant dense<0.000000e+00> : vector<2x384xf32>
    %21 = tpu.matmul %19, %20, %cst_19 {dimension_numbers = #tpu.dot_dimension_numbers<[1], [0], [0], [1], [0, 0, 1, 1], [], []>} : vector<2x128xf32>, vector<128x384xf32>, vector<2x384xf32> -> vector<2x384xf32>
    %c0_20 = arith.constant 0 : index
    %c0_21 = arith.constant 0 : index
    %22 = vector.load %arg9[%c0_20, %c0_21] : memref<1x384xf32, #tpu.memory_space<vmem>>, vector<1x384xf32>
    %23 = vector.broadcast %22 : vector<1x384xf32> to vector<2x384xf32>
    %24 = arith.addf %21, %23 : vector<2x384xf32>
    %25 = vector.extract_strided_slice %24 {offsets = [0, 128], sizes = [2, 128], strides = [1, 1]} : vector<2x384xf32> to vector<2x128xf32>
    %c0_22 = arith.constant 0 : index
    %c0_23 = arith.constant 0 : index
    %26 = vector.load %arg14[%c0_22, %c0_23] : memref<2x384xf32, #tpu.memory_space<vmem>>, vector<2x128xf32>
    tpu.vector_store %arg14[%c0_22, %c0_23], %25 {strides = array<i32>} : memref<2x384xf32, #tpu.memory_space<vmem>>, vector<2x128xf32>,
    %27 = vector.extract_strided_slice %24 {offsets = [0, 0], sizes = [2, 128], strides = [1, 1]} : vector<2x384xf32> to vector<2x128xf32>
    %c0_24 = arith.constant 0 : index
    %c0_25 = arith.constant 0 : index
    %28 = vector.load %arg10[%c0_24, %c0_25] : memref<128x1024xf32, #tpu.memory_space<vmem>>, vector<128x1024xf32>
    %cst_26 = arith.constant dense<0.000000e+00> : vector<2x1024xf32>
    %29 = tpu.matmul %27, %28, %cst_26 {dimension_numbers = #tpu.dot_dimension_numbers<[1], [0], [0], [1], [0, 0, 1, 1], [], []>} : vector<2x128xf32>, vector<128x1024xf32>, vector<2x1024xf32> -> vector<2x1024xf32>
    %c0_27 = arith.constant 0 : index
    %c0_28 = arith.constant 0 : index
    %30 = vector.load %arg11[%c0_27, %c0_28] : memref<128x1024xf32, #tpu.memory_space<vmem>>, vector<128x1024xf32>
    %cst_29 = arith.constant dense<0.000000e+00> : vector<2x1024xf32>
    %31 = tpu.matmul %27, %30, %cst_29 {dimension_numbers = #tpu.dot_dimension_numbers<[1], [0], [0], [1], [0, 0, 1, 1], [], []>} : vector<2x128xf32>, vector<128x1024xf32>, vector<2x1024xf32> -> vector<2x1024xf32>
    %32 = arith.mulf %29, %31 : vector<2x1024xf32>
    %c0_30 = arith.constant 0 : index
    %c0_31 = arith.constant 0 : index
    %33 = vector.load %arg12[%c0_30, %c0_31] : memref<1024x128xf32, #tpu.memory_space<vmem>>, vector<1024x128xf32>
    %cst_32 = arith.constant dense<0.000000e+00> : vector<2x128xf32>
    %34 = tpu.matmul %32, %33, %cst_32 {dimension_numbers = #tpu.dot_dimension_numbers<[1], [0], [0], [1], [0, 0, 1, 1], [], []>} : vector<2x1024xf32>, vector<1024x128xf32>, vector<2x128xf32> -> vector<2x128xf32>
    %35 = arith.negf %34 : vector<2x128xf32>
    %36 = math.exp %35 : vector<2x128xf32>
    %cst_33 = arith.constant 1.000000e+00 : f32
    %37 = vector.broadcast %cst_33 : f32 to vector<2x128xf32>
    %38 = arith.addf %37, %36 : vector<2x128xf32>
    %39 = arith.divf %37, %38 : vector<2x128xf32>
    %c0_34 = arith.constant 0 : index
    %c0_35 = arith.constant 0 : index
    %40 = vector.load %arg13[%c0_34, %c0_35] : memref<1x128xf32, #tpu.memory_space<vmem>>, vector<1x128xf32>
    %cst_36 = arith.constant 1.000000e+00 : f32
    %41 = vector.broadcast %cst_36 : f32 to vector<1x128xf32>
    %42 = arith.subf %41, %40 : vector<1x128xf32>
    %43 = vector.broadcast %42 : vector<1x128xf32> to vector<2x128xf32>
    %44 = arith.mulf %39, %43 : vector<2x128xf32>
    %45 = vector.broadcast %40 : vector<1x128xf32> to vector<2x128xf32>
    %46 = arith.addf %44, %45 : vector<2x128xf32>
    %c0_37 = arith.constant 0 : index
    %c128 = arith.constant 128 : index
    %47 = vector.load %arg14[%c0_37, %c128] : memref<2x384xf32, #tpu.memory_space<vmem>>, vector<2x128xf32>
    tpu.vector_store %arg14[%c0_37, %c128], %46 {strides = array<i32>} : memref<2x384xf32, #tpu.memory_space<vmem>>, vector<2x128xf32>,
    %48 = vector.extract_strided_slice %24 {offsets = [0, 256], sizes = [2, 128], strides = [1, 1]} : vector<2x384xf32> to vector<2x128xf32>
    %cst_38 = arith.constant dense<0xFF800000> : vector<2xf32>
    %49 = vector.multi_reduction <maximumf>, %48, %cst_38 [1] : vector<2x128xf32> to vector<2xf32>
    %50 = vector.shape_cast %49 : vector<2xf32> to vector<2x1xf32>
    %51 = vector.broadcast %50 : vector<2x1xf32> to vector<2x128xf32>
    %52 = arith.subf %48, %51 : vector<2x128xf32>
    %53 = math.exp %52 : vector<2x128xf32>
    %cst_39 = arith.constant dense<0.000000e+00> : vector<2xf32>
    %54 = vector.multi_reduction <add>, %53, %cst_39 [1] : vector<2x128xf32> to vector<2xf32>
    %55 = vector.shape_cast %54 : vector<2xf32> to vector<2x1xf32>
    %56 = tpu.reciprocal %55 {approx = true} : vector<2x1xf32> -> vector<2x1xf32>
    %57 = vector.broadcast %56 : vector<2x1xf32> to vector<2x128xf32>
    %58 = arith.mulf %53, %57 : vector<2x128xf32>
    %c0_40 = arith.constant 0 : index
    %c256 = arith.constant 256 : index
    %59 = vector.load %arg14[%c0_40, %c256] : memref<2x384xf32, #tpu.memory_space<vmem>>, vector<2x128xf32>
    tpu.vector_store %arg14[%c0_40, %c256], %58 {strides = array<i32>} : memref<2x384xf32, #tpu.memory_space<vmem>>, vector<2x128xf32>,
    return
  }
  func.func @transform_0(%arg0: i32) -> (i32, i32) {
    %c0_i32 = arith.constant 0 : i32
    %c0_i32_0 = arith.constant 0 : i32
    return %arg0, %c0_i32 : i32, i32
  }
  func.func @transform_1(%arg0: i32) -> (i32, i32) {
    %c0_i32 = arith.constant 0 : i32
    %c0_i32_0 = arith.constant 0 : i32
    %c0_i32_1 = arith.constant 0 : i32
    return %c0_i32, %c0_i32_0 : i32, i32
  }
  func.func @transform_2(%arg0: i32) -> (i32, i32) {
    %c0_i32 = arith.constant 0 : i32
    %c0_i32_0 = arith.constant 0 : i32
    %c0_i32_1 = arith.constant 0 : i32
    return %c0_i32, %c0_i32_0 : i32, i32
  }
  func.func @transform_3(%arg0: i32) -> (i32, i32) {
    %c0_i32 = arith.constant 0 : i32
    %c0_i32_0 = arith.constant 0 : i32
    %c0_i32_1 = arith.constant 0 : i32
    return %c0_i32, %c0_i32_0 : i32, i32
  }
  func.func @transform_4(%arg0: i32) -> (i32, i32) {
    %c0_i32 = arith.constant 0 : i32
    %c0_i32_0 = arith.constant 0 : i32
    %c0_i32_1 = arith.constant 0 : i32
    return %c0_i32, %c0_i32_0 : i32, i32
  }
  func.func @transform_5(%arg0: i32) -> (i32, i32) {
    %c0_i32 = arith.constant 0 : i32
    %c0_i32_0 = arith.constant 0 : i32
    %c0_i32_1 = arith.constant 0 : i32
    return %c0_i32, %c0_i32_0 : i32, i32
  }
  func.func @transform_6(%arg0: i32) -> (i32, i32) {
    %c0_i32 = arith.constant 0 : i32
    %c0_i32_0 = arith.constant 0 : i32
    %c0_i32_1 = arith.constant 0 : i32
    return %c0_i32, %c0_i32_0 : i32, i32
  }
  func.func @transform_7(%arg0: i32) -> (i32, i32) {
    %c0_i32 = arith.constant 0 : i32
    %c0_i32_0 = arith.constant 0 : i32
    %c0_i32_1 = arith.constant 0 : i32
    return %c0_i32, %c0_i32_0 : i32, i32
  }
  func.func @transform_8(%arg0: i32) -> (i32, i32) {
    %c0_i32 = arith.constant 0 : i32
    %c0_i32_0 = arith.constant 0 : i32
    %c0_i32_1 = arith.constant 0 : i32
    return %c0_i32, %c0_i32_0 : i32, i32
  }
  func.func @transform_9(%arg0: i32) -> (i32, i32) {
    %c0_i32 = arith.constant 0 : i32
    %c0_i32_0 = arith.constant 0 : i32
    %c0_i32_1 = arith.constant 0 : i32
    return %c0_i32, %c0_i32_0 : i32, i32
  }
  func.func @transform_10(%arg0: i32) -> (i32, i32) {
    %c0_i32 = arith.constant 0 : i32
    %c0_i32_0 = arith.constant 0 : i32
    %c0_i32_1 = arith.constant 0 : i32
    return %c0_i32, %c0_i32_0 : i32, i32
  }
  func.func @transform_11(%arg0: i32) -> (i32, i32) {
    %c0_i32 = arith.constant 0 : i32
    %c0_i32_0 = arith.constant 0 : i32
    %c0_i32_1 = arith.constant 0 : i32
    return %c0_i32, %c0_i32_0 : i32, i32
  }
  func.func @transform_12(%arg0: i32) -> (i32, i32) {
    %c0_i32 = arith.constant 0 : i32
    %c0_i32_0 = arith.constant 0 : i32
    %c0_i32_1 = arith.constant 0 : i32
    return %c0_i32, %c0_i32_0 : i32, i32
  }
  func.func @transform_13(%arg0: i32) -> (i32, i32) {
    %c0_i32 = arith.constant 0 : i32
    %c0_i32_0 = arith.constant 0 : i32
    return %arg0, %c0_i32 : i32, i32
  }
}

</mosaic_0001>

<llo_original>
// kernel: decoder_mlp_forward.1
$region0: #{decoder_mlp_forward.1}
  #allocation0 [shape = 'u32[]', space=smem, size = 0x4, offset = 0x4, fixed_abs, tag = 'smem constant byte address 0x4 - core index']
  #allocation1 [shape = 'u32[144,128]{1,0:T(1,128)}', space=vmem, size = 0x12000, scoped, tag = 'internal scratch']
  %s0 = inlined_call_operand.hbm [shape: f32[2,32], index: 0, kind: input, shape index: {}]
  %s1 = inlined_call_operand.hbm [shape: f32[32,128], index: 1, kind: input, shape index: {}]
  %s2 = inlined_call_operand.vmem [shape: f32[1,128], index: 2, kind: input, shape index: {}]
  %s3 = inlined_call_operand.hbm [shape: f32[128,128], index: 3, kind: input, shape index: {}]
  %s4 = inlined_call_operand.vmem [shape: f32[1,128], index: 4, kind: input, shape index: {}]
  %s5 = inlined_call_operand.hbm [shape: f32[128,128], index: 5, kind: input, shape index: {}]
  %s6 = inlined_call_operand.vmem [shape: f32[1,128], index: 6, kind: input, shape index: {}]
  %s7 = inlined_call_operand.hbm [shape: f32[128,384], index: 7, kind: input, shape index: {}]
  %s8 = inlined_call_operand.vmem [shape: f32[1,384], index: 8, kind: input, shape index: {}]
  %s9 = inlined_call_operand.hbm [shape: f32[128,1024], index: 9, kind: input, shape index: {}]
  %s10 = inlined_call_operand.hbm [shape: f32[128,1024], index: 10, kind: input, shape index: {}]
  %s11 = inlined_call_operand.hbm [shape: f32[1024,128], index: 11, kind: input, shape index: {}]
  %s12 = inlined_call_operand.vmem [shape: f32[1,128], index: 12, kind: input, shape index: {}]
  %s13 = inlined_call_operand.vmem [shape: f32[2,384], index: 13, kind: output, shape index: {}]
  %s14 = sld [smem:[#allocation0]]
  $region94: #{decoder_mlp_forward.1} parent=0
    _
  %s16 = ssub.s32 1, %s14
  %s17 = scalar_select 0, %s16, %s14
  $region1: #{decoder_mlp_forward.1} parent=0
    #allocation2 [shape = 'u8[1024]{0}', space=vmem, size = 0x400, scoped, tag = 'input window, operand 0, single buffered']
    #allocation3 [shape = 's32[1]{0}', space=sflag, size = 0x4, scoped, tag = 'scoped memory for decoder_mlp_forward.1']
    #allocation4 [shape = 'u8[16384]{0}', space=vmem, size = 0x4000, scoped, tag = 'input window, operand 1, single buffered']
    #allocation5 [shape = 's32[1]{0}', space=sflag, size = 0x4, scoped, tag = 'scoped memory for decoder_mlp_forward.1']
    #allocation6 [shape = 'u8[65536]{0}', space=vmem, size = 0x10000, scoped, tag = 'input window, operand 3, single buffered']
    #allocation7 [shape = 'u8[65536]{0}', space=vmem, size = 0x10000, scoped, tag = 'input window, operand 5, single buffered']
    #allocation8 [shape = 's32[1]{0}', space=sflag, size = 0x4, scoped, tag = 'scoped memory for decoder_mlp_forward.1']
    #allocation9 [shape = 'u8[196608]{0}', space=vmem, size = 0x30000, scoped, tag = 'input window, operand 7, single buffered']
    #allocation10 [shape = 'u8[524288]{0}', space=vmem, size = 0x80000, scoped, tag = 'input window, operand 9, single buffered']
    #allocation11 [shape = 's32[1]{0}', space=sflag, size = 0x4, scoped, tag = 'scoped memory for decoder_mlp_forward.1']
    #allocation12 [shape = 'u8[524288]{0}', space=vmem, size = 0x80000, scoped, tag = 'input window, operand 10, single buffered']
    #allocation13 [shape = 'u8[524288]{0}', space=vmem, size = 0x80000, scoped, tag = 'input window, operand 11, single buffered']
    #allocation14 [shape = 's32[1]{0}', space=sflag, size = 0x4, scoped, tag = 'scoped memory for decoder_mlp_forward.1']
    %18 = vsyncpa [#allocation3], 0
    %19 = vsyncpa [#allocation5], 0
    %20 = vsyncpa [#allocation8], 0
    %21 = vsyncpa [#allocation11], 0
    %22 = vsyncpa [#allocation14], 0
    // Predicated region
    $region2: #{decoder_mlp_forward.1} parent=1 // pred_check
      _
    $region3: #{decoder_mlp_forward.1} parent=1 // pred_check_branch
      %24 = sbr.rel (0) target = $region5
    $region4: #{decoder_mlp_forward.1} parent=1 // pred_region
      %s26 = ssub.s32 32, 32
      %27 = vsyncadd [#allocation3], %s26
      %s29 = sshll.u32 [#allocation2], 4
      %s30 = int_to_ptr.vmem [resolvable:$true] %s29
      %32 = dma.hbm_to_vmem [thread:$0]  %s0, 32, %s30, [#allocation3]
    $region5: #{decoder_mlp_forward.1} parent=1 // pred_fallthru
      _
    // Predicated region
    $region6: #{decoder_mlp_forward.1} parent=1 // pred_check
      _
    $region7: #{decoder_mlp_forward.1} parent=1 // pred_check_branch
      %34 = sbr.rel (0) target = $region9
    $region8: #{decoder_mlp_forward.1} parent=1 // pred_region
      %s36 = ssub.s32 512, 512
      %37 = vsyncadd [#allocation5], %s36
      %s38 = sshll.u32 [#allocation4], 4
      %s39 = int_to_ptr.vmem [resolvable:$true] %s38
      %44 = dma.hbm_to_vmem [thread:$0]  %s1, 512, %s39, [#allocation5], 128, 128, 8
    $region9: #{decoder_mlp_forward.1} parent=1 // pred_fallthru
      _
    // Predicated region
    $region10: #{decoder_mlp_forward.1} parent=1 // pred_check
      _
    $region11: #{decoder_mlp_forward.1} parent=1 // pred_check_branch
      %46 = sbr.rel (0) target = $region13
    $region12: #{decoder_mlp_forward.1} parent=1 // pred_region
      _
    $region13: #{decoder_mlp_forward.1} parent=1 // pred_fallthru
      _
    // Predicated region
    $region14: #{decoder_mlp_forward.1} parent=1 // pred_check
      _
    $region15: #{decoder_mlp_forward.1} parent=1 // pred_check_branch
      %48 = sbr.rel (0) target = $region17
    $region16: #{decoder_mlp_forward.1} parent=1 // pred_region
      %s50 = ssub.s32 2048, 2048
      %51 = vsyncadd [#allocation5], %s50
      %s52 = sshll.u32 [#allocation6], 4
      %s53 = int_to_ptr.vmem [resolvable:$true] %s52
      %58 = dma.hbm_to_vmem [thread:$0]  %s3, 2048, %s53, [#allocation5], 128, 128, 8
    $region17: #{decoder_mlp_forward.1} parent=1 // pred_fallthru
      _
    // Predicated region
    $region18: #{decoder_mlp_forward.1} parent=1 // pred_check
      _
    $region19: #{decoder_mlp_forward.1} parent=1 // pred_check_branch
      %60 = sbr.rel (0) target = $region21
    $region20: #{decoder_mlp_forward.1} parent=1 // pred_region
      _
    $region21: #{decoder_mlp_forward.1} parent=1 // pred_fallthru
      _
    // Predicated region
    $region22: #{decoder_mlp_forward.1} parent=1 // pred_check
      _
    $region23: #{decoder_mlp_forward.1} parent=1 // pred_check_branch
      %62 = sbr.rel (0) target = $region25
    $region24: #{decoder_mlp_forward.1} parent=1 // pred_region
      %s64 = ssub.s32 2048, 2048
      %65 = vsyncadd [#allocation8], %s64
      %s66 = sshll.u32 [#allocation7], 4
      %s67 = int_to_ptr.vmem [resolvable:$true] %s66
      %72 = dma.hbm_to_vmem [thread:$0]  %s5, 2048, %s67, [#allocation8], 128, 128, 8
    $region25: #{decoder_mlp_forward.1} parent=1 // pred_fallthru
      _
    // Predicated region
    $region26: #{decoder_mlp_forward.1} parent=1 // pred_check
      _
    $region27: #{decoder_mlp_forward.1} parent=1 // pred_check_branch
      %74 = sbr.rel (0) target = $region29
    $region28: #{decoder_mlp_forward.1} parent=1 // pred_region
      _
    $region29: #{decoder_mlp_forward.1} parent=1 // pred_fallthru
      _
    // Predicated region
    $region30: #{decoder_mlp_forward.1} parent=1 // pred_check
      _
    $region31: #{decoder_mlp_forward.1} parent=1 // pred_check_branch
      %76 = sbr.rel (0) target = $region33
    $region32: #{decoder_mlp_forward.1} parent=1 // pred_region
      %s78 = ssub.s32 6144, 6144
      %79 = vsyncadd [#allocation8], %s78
      %s80 = sshll.u32 [#allocation9], 4
      %s81 = int_to_ptr.vmem [resolvable:$true] %s80
      %86 = dma.hbm_to_vmem [thread:$0]  %s7, 6144, %s81, [#allocation8], 384, 384, 24
    $region33: #{decoder_mlp_forward.1} parent=1 // pred_fallthru
      _
    // Predicated region
    $region34: #{decoder_mlp_forward.1} parent=1 // pred_check
      _
    $region35: #{decoder_mlp_forward.1} parent=1 // pred_check_branch
      %88 = sbr.rel (0) target = $region37
    $region36: #{decoder_mlp_forward.1} parent=1 // pred_region
      _
    $region37: #{decoder_mlp_forward.1} parent=1 // pred_fallthru
      _
    // Predicated region
    $region38: #{decoder_mlp_forward.1} parent=1 // pred_check
      _
    $region39: #{decoder_mlp_forward.1} parent=1 // pred_check_branch
      %90 = sbr.rel (0) target = $region41
    $region40: #{decoder_mlp_forward.1} parent=1 // pred_region
      %s92 = ssub.s32 16384, 16384
      %93 = vsyncadd [#allocation11], %s92
      %s94 = sshll.u32 [#allocation10], 4
      %s95 = int_to_ptr.vmem [resolvable:$true] %s94
      %100 = dma.hbm_to_vmem [thread:$0]  %s9, 16384, %s95, [#allocation11], 1024, 1024, 64
    $region41: #{decoder_mlp_forward.1} parent=1 // pred_fallthru
      _
    // Predicated region
    $region42: #{decoder_mlp_forward.1} parent=1 // pred_check
      _
    $region43: #{decoder_mlp_forward.1} parent=1 // pred_check_branch
      %102 = sbr.rel (0) target = $region45
    $region44: #{decoder_mlp_forward.1} parent=1 // pred_region
      %s104 = ssub.s32 16384, 16384
      %105 = vsyncadd [#allocation11], %s104
      %s106 = sshll.u32 [#allocation12], 4
      %s107 = int_to_ptr.vmem [resolvable:$true] %s106
      %112 = dma.hbm_to_vmem [thread:$0]  %s10, 16384, %s107, [#allocation11], 1024, 1024, 64
    $region45: #{decoder_mlp_forward.1} parent=1 // pred_fallthru
      _
    // Predicated region
    $region46: #{decoder_mlp_forward.1} parent=1 // pred_check
      _
    $region47: #{decoder_mlp_forward.1} parent=1 // pred_check_branch
      %114 = sbr.rel (0) target = $region49
    $region48: #{decoder_mlp_forward.1} parent=1 // pred_region
      %s116 = ssub.s32 16384, 16384
      %117 = vsyncadd [#allocation14], %s116
      %s118 = sshll.u32 [#allocation13], 4
      %s119 = int_to_ptr.vmem [resolvable:$true] %s118
      %124 = dma.hbm_to_vmem [thread:$0]  %s11, 16384, %s119, [#allocation14], 128, 128, 8
    $region49: #{decoder_mlp_forward.1} parent=1 // pred_fallthru
      _
    // Predicated region
    $region50: #{decoder_mlp_forward.1} parent=1 // pred_check
      _
    $region51: #{decoder_mlp_forward.1} parent=1 // pred_check_branch
      %126 = sbr.rel (0) target = $region53
    $region52: #{decoder_mlp_forward.1} parent=1 // pred_region
      _
    $region53: #{decoder_mlp_forward.1} parent=1 // pred_fallthru
      _
    // Predicated region
    $region54: #{decoder_mlp_forward.1} parent=1 // pred_check
      _
    $region55: #{decoder_mlp_forward.1} parent=1 // pred_check_branch
      %128 = sbr.rel (0) target = $region57
    $region56: #{decoder_mlp_forward.1} parent=1 // pred_region
      %129 = dma.done [#allocation3], 32
    $region57: #{decoder_mlp_forward.1} parent=1 // pred_fallthru
      _
    // Predicated region
    $region58: #{decoder_mlp_forward.1} parent=1 // pred_check
      _
    $region59: #{decoder_mlp_forward.1} parent=1 // pred_check_branch
      %131 = sbr.rel (0) target = $region61
    $region60: #{decoder_mlp_forward.1} parent=1 // pred_region
      %132 = dma.done [#allocation5], 512
    $region61: #{decoder_mlp_forward.1} parent=1 // pred_fallthru
      _
    // Predicated region
    $region62: #{decoder_mlp_forward.1} parent=1 // pred_check
      _
    $region63: #{decoder_mlp_forward.1} parent=1 // pred_check_branch
      %134 = sbr.rel (0) target = $region65
    $region64: #{decoder_mlp_forward.1} parent=1 // pred_region
      %135 = dma.done [#allocation5], 2048
    $region65: #{decoder_mlp_forward.1} parent=1 // pred_fallthru
      _
    // Predicated region
    $region66: #{decoder_mlp_forward.1} parent=1 // pred_check
      _
    $region67: #{decoder_mlp_forward.1} parent=1 // pred_check_branch
      %137 = sbr.rel (0) target = $region69
    $region68: #{decoder_mlp_forward.1} parent=1 // pred_region
      %138 = dma.done [#allocation8], 2048
    $region69: #{decoder_mlp_forward.1} parent=1 // pred_fallthru
      _
    // Predicated region
    $region70: #{decoder_mlp_forward.1} parent=1 // pred_check
      _
    $region71: #{decoder_mlp_forward.1} parent=1 // pred_check_branch
      %140 = sbr.rel (0) target = $region73
    $region72: #{decoder_mlp_forward.1} parent=1 // pred_region
      %141 = dma.done [#allocation8], 6144
    $region73: #{decoder_mlp_forward.1} parent=1 // pred_fallthru
      _
    // Predicated region
    $region74: #{decoder_mlp_forward.1} parent=1 // pred_check
      _
    $region75: #{decoder_mlp_forward.1} parent=1 // pred_check_branch
      %143 = sbr.rel (0) target = $region77
    $region76: #{decoder_mlp_forward.1} parent=1 // pred_region
      %144 = dma.done [#allocation11], 16384
    $region77: #{decoder_mlp_forward.1} parent=1 // pred_fallthru
      _
    // Predicated region
    $region78: #{decoder_mlp_forward.1} parent=1 // pred_check
      _
    $region79: #{decoder_mlp_forward.1} parent=1 // pred_check_branch
      %146 = sbr.rel (0) target = $region81
    $region80: #{decoder_mlp_forward.1} parent=1 // pred_region
      %147 = dma.done [#allocation11], 16384
    $region81: #{decoder_mlp_forward.1} parent=1 // pred_fallthru
      _
    // Predicated region
    $region82: #{decoder_mlp_forward.1} parent=1 // pred_check
      _
    $region83: #{decoder_mlp_forward.1} parent=1 // pred_check_branch
      %149 = sbr.rel (0) target = $region85
    $region84: #{decoder_mlp_forward.1} parent=1 // pred_region
      %150 = dma.done [#allocation14], 16384
    $region85: #{decoder_mlp_forward.1} parent=1 // pred_fallthru
      _
    %v151 = vld [vmem:[#allocation2] sm:$0x3]
    %v152 = vld [vmem:[#allocation4] sm:$0xff]
    %v153 = vld [vmem:[#allocation4 + $0x8] sm:$0xff]
    %v154 = vld [vmem:[#allocation4 + $0x10] sm:$0xff]
    %v155 = vld [vmem:[#allocation4 + $0x18] sm:$0xff]
    %v156 = vld [vmem:[%s2] sm:$0x1]
    %v158 = vlaneseq
    %v159 = vshrl.u32 %v158, 7
    %v160 = vsub.s32 0, %v159
    %v161 = vrot.slane %v156, %v160
    %vm163 = vcmask 261120
    %v165 = vsel %vm163, %v151, 0
    %167 = vmatprep.subr.mxu0 0.0
    %168 = vmatpush1.msra.mxu0 %v152
    %169 = vmatprep.subr.mxu0 0.0
    %170 = vmatpush1.msra.mxu0 %v153
    %171 = vmatprep.subr.mxu0 0.0
    %172 = vmatpush1.msra.mxu0 %v154
    %173 = vmatprep.subr.mxu0 0.0
    %174 = vmatpush1.msra.mxu0 %v155
    %175 = vmatprep.subr.mxu0 0.0
    %176 = vmatpush1.msra.mxu0 0.0
    %177 = vmatprep.subr.mxu0 0.0
    %178 = vmatpush1.msra.mxu0 0.0
    %179 = vmatprep.subr.mxu0 0.0
    %180 = vmatpush1.msra.mxu0 0.0
    %181 = vmatprep.subr.mxu0 0.0
    %182 = vmatpush1.msra.mxu0 0.0
    %183 = vmatprep.subr.mxu0 0.0
    %184 = vmatpush1.msra.mxu0 0.0
    %185 = vmatprep.subr.mxu0 0.0
    %186 = vmatpush1.msra.mxu0 0.0
    %187 = vmatprep.subr.mxu0 0.0
    %188 = vmatpush1.msra.mxu0 0.0
    %189 = vmatprep.subr.mxu0 0.0
    %190 = vmatpush1.msra.mxu0 0.0
    %191 = vmatprep.subr.mxu0 0.0
    %192 = vmatpush1.msra.mxu0 0.0
    %193 = vmatprep.subr.mxu0 0.0
    %194 = vmatpush1.msra.mxu0 0.0
    %195 = vmatprep.subr.mxu0 0.0
    %196 = vmatpush1.msra.mxu0 0.0
    %197 = vmatprep.subr.mxu0 0.0
    %198 = vmatpush1.msra.mxu0 0.0
    %199 = vmatprep.subr.mxu0 0.0
    %200 = vmatpush1.msra.mxu0 0.0
    %201 = vmatprep.subr.mxu0 0.0
    %202 = vmatpush1.msra.mxu0 0.0
    %203 = vmatprep.subr.mxu0 0.0
    %204 = vmatpush1.msra.mxu0 0.0
    %205 = vmatprep.subr.mxu0 0.0
    %206 = vmatpush1.msra.mxu0 0.0
    %207 = vmatprep.subr.mxu0 0.0
    %208 = vmatpush1.msra.mxu0 0.0
    %209 = vmatprep.subr.mxu0 0.0
    %210 = vmatpush1.msra.mxu0 0.0
    %211 = vmatprep.subr.mxu0 0.0
    %212 = vmatpush1.msra.mxu0 0.0
    %213 = vmatprep.subr.mxu0 0.0
    %214 = vmatpush1.msra.mxu0 0.0
    %215 = vmatprep.subr.mxu0 0.0
    %216 = vmatpush1.msra.mxu0 0.0
    %217 = vmatprep.subr.mxu0 0.0
    %218 = vmatpush1.msra.mxu0 0.0
    %219 = vmatprep.subr.mxu0 0.0
    %220 = vmatpush1.msra.mxu0 0.0
    %221 = vmatprep.subr.mxu0 0.0
    %222 = vmatpush1.msra.mxu0 0.0
    %223 = vmatprep.subr.mxu0 0.0
    %224 = vmatpush1.msra.mxu0 0.0
    %225 = vmatprep.subr.mxu0 0.0
    %226 = vmatpush1.msra.mxu0 0.0
    %227 = vmatprep.subr.mxu0 0.0
    %228 = vmatpush1.msra.mxu0 0.0
    %229 = vmatprep.subr.mxu0 0.0
    %230 = vmatpush1.msra.mxu0 0.0
    %231 = vmatprep.mubr.f32.mxu0 0.0
    %232 = vmatmul.mubr.f32.gmra.mrb[0].mxu0 %v165
    %v233 = vpop.f32.mrb[0].mxu0
    %v234 = vadd.f32 %v161, %v233
    %v235 = vpop.f32.mrb[0].mxu0
    %236 = vdwg.mxu0
    %v237 = vmax.f32 %v234, 0.0
    %v238 = vld [vmem:[#allocation6] sm:$0xff]
    %v239 = vld [vmem:[#allocation6 + $0x8] sm:$0xff]
    %v240 = vld [vmem:[#allocation6 + $0x10] sm:$0xff]
    %v241 = vld [vmem:[#allocation6 + $0x18] sm:$0xff]
    %v242 = vld [vmem:[#allocation6 + $0x20] sm:$0xff]
    %v243 = vld [vmem:[#allocation6 + $0x28] sm:$0xff]
    %v244 = vld [vmem:[#allocation6 + $0x30] sm:$0xff]
    %v245 = vld [vmem:[#allocation6 + $0x38] sm:$0xff]
    %v246 = vld [vmem:[#allocation6 + $0x40] sm:$0xff]
    %v247 = vld [vmem:[#allocation6 + $0x48] sm:$0xff]
    %v248 = vld [vmem:[#allocation6 + $0x50] sm:$0xff]
    %v249 = vld [vmem:[#allocation6 + $0x58] sm:$0xff]
    %v250 = vld [vmem:[#allocation6 + $0x60] sm:$0xff]
    %v251 = vld [vmem:[#allocation6 + $0x68] sm:$0xff]
    %v252 = vld [vmem:[#allocation6 + $0x70] sm:$0xff]
    %v253 = vld [vmem:[#allocation6 + $0x78] sm:$0xff]
    %v254 = vld [vmem:[%s4] sm:$0x1]
    %v256 = vlaneseq
    %v257 = vshrl.u32 %v256, 7
    %v258 = vsub.s32 0, %v257
    %v259 = vrot.slane %v254, %v258
    %261 = vmatprep.subr.mxu0 0.0
    %262 = vmatpush1.msra.mxu0 %v238
    %263 = vmatprep.subr.mxu0 0.0
    %264 = vmatpush1.msra.mxu0 %v239
    %265 = vmatprep.subr.mxu0 0.0
    %266 = vmatpush1.msra.mxu0 %v240
    %267 = vmatprep.subr.mxu0 0.0
    %268 = vmatpush1.msra.mxu0 %v241
    %269 = vmatprep.subr.mxu0 0.0
    %270 = vmatpush1.msra.mxu0 %v242
    %271 = vmatprep.subr.mxu0 0.0
    %272 = vmatpush1.msra.mxu0 %v243
    %273 = vmatprep.subr.mxu0 0.0
    %274 = vmatpush1.msra.mxu0 %v244
    %275 = vmatprep.subr.mxu0 0.0
    %276 = vmatpush1.msra.mxu0 %v245
    %277 = vmatprep.subr.mxu0 0.0
    %278 = vmatpush1.msra.mxu0 %v246
    %279 = vmatprep.subr.mxu0 0.0
    %280 = vmatpush1.msra.mxu0 %v247
    %281 = vmatprep.subr.mxu0 0.0
    %282 = vmatpush1.msra.mxu0 %v248
    %283 = vmatprep.subr.mxu0 0.0
    %284 = vmatpush1.msra.mxu0 %v249
    %285 = vmatprep.subr.mxu0 0.0
    %286 = vmatpush1.msra.mxu0 %v250
    %287 = vmatprep.subr.mxu0 0.0
    %288 = vmatpush1.msra.mxu0 %v251
    %289 = vmatprep.subr.mxu0 0.0
    %290 = vmatpush1.msra.mxu0 %v252
    %291 = vmatprep.subr.mxu0 0.0
    %292 = vmatpush1.msra.mxu0 %v253
    %293 = vmatprep.subr.mxu0 0.0
    %294 = vmatpush1.msra.mxu0 0.0
    %295 = vmatprep.subr.mxu0 0.0
    %296 = vmatpush1.msra.mxu0 0.0
    %297 = vmatprep.subr.mxu0 0.0
    %298 = vmatpush1.msra.mxu0 0.0
    %299 = vmatprep.subr.mxu0 0.0
    %300 = vmatpush1.msra.mxu0 0.0
    %301 = vmatprep.subr.mxu0 0.0
    %302 = vmatpush1.msra.mxu0 0.0
    %303 = vmatprep.subr.mxu0 0.0
    %304 = vmatpush1.msra.mxu0 0.0
    %305 = vmatprep.subr.mxu0 0.0
    %306 = vmatpush1.msra.mxu0 0.0
    %307 = vmatprep.subr.mxu0 0.0
    %308 = vmatpush1.msra.mxu0 0.0
    %309 = vmatprep.subr.mxu0 0.0
    %310 = vmatpush1.msra.mxu0 0.0
    %311 = vmatprep.subr.mxu0 0.0
    %312 = vmatpush1.msra.mxu0 0.0
    %313 = vmatprep.subr.mxu0 0.0
    %314 = vmatpush1.msra.mxu0 0.0
    %315 = vmatprep.subr.mxu0 0.0
    %316 = vmatpush1.msra.mxu0 0.0
    %317 = vmatprep.subr.mxu0 0.0
    %318 = vmatpush1.msra.mxu0 0.0
    %319 = vmatprep.subr.mxu0 0.0
    %320 = vmatpush1.msra.mxu0 0.0
    %321 = vmatprep.subr.mxu0 0.0
    %322 = vmatpush1.msra.mxu0 0.0
    %323 = vmatprep.subr.mxu0 0.0
    %324 = vmatpush1.msra.mxu0 0.0
    %325 = vmatprep.mubr.f32.mxu0 0.0
    %326 = vmatmul.mubr.f32.gmra.mrb[0].mxu0 %v237
    %v327 = vpop.f32.mrb[0].mxu0
    %v328 = vadd.f32 %v259, %v327
    %v329 = vpop.f32.mrb[0].mxu0
    %330 = vdwg.mxu0
    %v331 = vmax.f32 %v328, 0.0
    %v332 = vld [vmem:[#allocation7] sm:$0xff]
    %v333 = vld [vmem:[#allocation7 + $0x8] sm:$0xff]
    %v334 = vld [vmem:[#allocation7 + $0x10] sm:$0xff]
    %v335 = vld [vmem:[#allocation7 + $0x18] sm:$0xff]
    %v336 = vld [vmem:[#allocation7 + $0x20] sm:$0xff]
    %v337 = vld [vmem:[#allocation7 + $0x28] sm:$0xff]
    %v338 = vld [vmem:[#allocation7 + $0x30] sm:$0xff]
    %v339 = vld [vmem:[#allocation7 + $0x38] sm:$0xff]
    %v340 = vld [vmem:[#allocation7 + $0x40] sm:$0xff]
    %v341 = vld [vmem:[#allocation7 + $0x48] sm:$0xff]
    %v342 = vld [vmem:[#allocation7 + $0x50] sm:$0xff]
    %v343 = vld [vmem:[#allocation7 + $0x58] sm:$0xff]
    %v344 = vld [vmem:[#allocation7 + $0x60] sm:$0xff]
    %v345 = vld [vmem:[#allocation7 + $0x68] sm:$0xff]
    %v346 = vld [vmem:[#allocation7 + $0x70] sm:$0xff]
    %v347 = vld [vmem:[#allocation7 + $0x78] sm:$0xff]
    %v348 = vld [vmem:[%s6] sm:$0x1]
    %v350 = vlaneseq
    %v351 = vshrl.u32 %v350, 7
    %v352 = vsub.s32 0, %v351
    %v353 = vrot.slane %v348, %v352
    %355 = vmatprep.subr.mxu0 0.0
    %356 = vmatpush1.msra.mxu0 %v332
    %357 = vmatprep.subr.mxu0 0.0
    %358 = vmatpush1.msra.mxu0 %v333
    %359 = vmatprep.subr.mxu0 0.0
    %360 = vmatpush1.msra.mxu0 %v334
    %361 = vmatprep.subr.mxu0 0.0
    %362 = vmatpush1.msra.mxu0 %v335
    %363 = vmatprep.subr.mxu0 0.0
    %364 = vmatpush1.msra.mxu0 %v336
    %365 = vmatprep.subr.mxu0 0.0
    %366 = vmatpush1.msra.mxu0 %v337
    %367 = vmatprep.subr.mxu0 0.0
    %368 = vmatpush1.msra.mxu0 %v338
    %369 = vmatprep.subr.mxu0 0.0
    %370 = vmatpush1.msra.mxu0 %v339
    %371 = vmatprep.subr.mxu0 0.0
    %372 = vmatpush1.msra.mxu0 %v340
    %373 = vmatprep.subr.mxu0 0.0
    %374 = vmatpush1.msra.mxu0 %v341
    %375 = vmatprep.subr.mxu0 0.0
    %376 = vmatpush1.msra.mxu0 %v342
    %377 = vmatprep.subr.mxu0 0.0
    %378 = vmatpush1.msra.mxu0 %v343
    %379 = vmatprep.subr.mxu0 0.0
    %380 = vmatpush1.msra.mxu0 %v344
    %381 = vmatprep.subr.mxu0 0.0
    %382 = vmatpush1.msra.mxu0 %v345
    %383 = vmatprep.subr.mxu0 0.0
    %384 = vmatpush1.msra.mxu0 %v346
    %385 = vmatprep.subr.mxu0 0.0
    %386 = vmatpush1.msra.mxu0 %v347
    %387 = vmatprep.subr.mxu0 0.0
    %388 = vmatpush1.msra.mxu0 0.0
    %389 = vmatprep.subr.mxu0 0.0
    %390 = vmatpush1.msra.mxu0 0.0
    %391 = vmatprep.subr.mxu0 0.0
    %392 = vmatpush1.msra.mxu0 0.0
    %393 = vmatprep.subr.mxu0 0.0
    %394 = vmatpush1.msra.mxu0 0.0
    %395 = vmatprep.subr.mxu0 0.0
    %396 = vmatpush1.msra.mxu0 0.0
    %397 = vmatprep.subr.mxu0 0.0
    %398 = vmatpush1.msra.mxu0 0.0
    %399 = vmatprep.subr.mxu0 0.0
    %400 = vmatpush1.msra.mxu0 0.0
    %401 = vmatprep.subr.mxu0 0.0
    %402 = vmatpush1.msra.mxu0 0.0
    %403 = vmatprep.subr.mxu0 0.0
    %404 = vmatpush1.msra.mxu0 0.0
    %405 = vmatprep.subr.mxu0 0.0
    %406 = vmatpush1.msra.mxu0 0.0
    %407 = vmatprep.subr.mxu0 0.0
    %408 = vmatpush1.msra.mxu0 0.0
    %409 = vmatprep.subr.mxu0 0.0
    %410 = vmatpush1.msra.mxu0 0.0
    %411 = vmatprep.subr.mxu0 0.0
    %412 = vmatpush1.msra.mxu0 0.0
    %413 = vmatprep.subr.mxu0 0.0
    %414 = vmatpush1.msra.mxu0 0.0
    %415 = vmatprep.subr.mxu0 0.0
    %416 = vmatpush1.msra.mxu0 0.0
    %417 = vmatprep.subr.mxu0 0.0
    %418 = vmatpush1.msra.mxu0 0.0
    %419 = vmatprep.mubr.f32.mxu0 0.0
    %420 = vmatmul.mubr.f32.gmra.mrb[0].mxu0 %v331
    %v421 = vpop.f32.mrb[0].mxu0
    %v422 = vadd.f32 %v353, %v421
    %v423 = vpop.f32.mrb[0].mxu0
    %424 = vdwg.mxu0
    %v425 = vld [vmem:[#allocation9] sm:$0xff]
    %v426 = vld [vmem:[#allocation9 + $0x8] sm:$0xff]
    %v427 = vld [vmem:[#allocation9 + $0x10] sm:$0xff]
    %v428 = vld [vmem:[#allocation9 + $0x18] sm:$0xff]
    %v429 = vld [vmem:[#allocation9 + $0x20] sm:$0xff]
    %v430 = vld [vmem:[#allocation9 + $0x28] sm:$0xff]
    %v431 = vld [vmem:[#allocation9 + $0x30] sm:$0xff]
    %v432 = vld [vmem:[#allocation9 + $0x38] sm:$0xff]
    %v433 = vld [vmem:[#allocation9 + $0x40] sm:$0xff]
    %v434 = vld [vmem:[#allocation9 + $0x48] sm:$0xff]
    %v435 = vld [vmem:[#allocation9 + $0x50] sm:$0xff]
    %v436 = vld [vmem:[#allocation9 + $0x58] sm:$0xff]
    %v437 = vld [vmem:[#allocation9 + $0x60] sm:$0xff]
    %v438 = vld [vmem:[#allocation9 + $0x68] sm:$0xff]
    %v439 = vld [vmem:[#allocation9 + $0x70] sm:$0xff]
    %v440 = vld [vmem:[#allocation9 + $0x78] sm:$0xff]
    %v441 = vld [vmem:[#allocation9 + $0x80] sm:$0xff]
    %v442 = vld [vmem:[#allocation9 + $0x88] sm:$0xff]
    %v443 = vld [vmem:[#allocation9 + $0x90] sm:$0xff]
    %v444 = vld [vmem:[#allocation9 + $0x98] sm:$0xff]
    %v445 = vld [vmem:[#allocation9 + $0xa0] sm:$0xff]
    %v446 = vld [vmem:[#allocation9 + $0xa8] sm:$0xff]
    %v447 = vld [vmem:[#allocation9 + $0xb0] sm:$0xff]
    %v448 = vld [vmem:[#allocation9 + $0xb8] sm:$0xff]
    %v449 = vld [vmem:[#allocation9 + $0xc0] sm:$0xff]
    %v450 = vld [vmem:[#allocation9 + $0xc8] sm:$0xff]
    %v451 = vld [vmem:[#allocation9 + $0xd0] sm:$0xff]
    %v452 = vld [vmem:[#allocation9 + $0xd8] sm:$0xff]
    %v453 = vld [vmem:[#allocation9 + $0xe0] sm:$0xff]
    %v454 = vld [vmem:[#allocation9 + $0xe8] sm:$0xff]
    %v455 = vld [vmem:[#allocation9 + $0xf0] sm:$0xff]
    %v456 = vld [vmem:[#allocation9 + $0xf8] sm:$0xff]
    %v457 = vld [vmem:[#allocation9 + $0x100] sm:$0xff]
    %v458 = vld [vmem:[#allocation9 + $0x108] sm:$0xff]
    %v459 = vld [vmem:[#allocation9 + $0x110] sm:$0xff]
    %v460 = vld [vmem:[#allocation9 + $0x118] sm:$0xff]
    %v461 = vld [vmem:[#allocation9 + $0x120] sm:$0xff]
    %v462 = vld [vmem:[#allocation9 + $0x128] sm:$0xff]
    %v463 = vld [vmem:[#allocation9 + $0x130] sm:$0xff]
    %v464 = vld [vmem:[#allocation9 + $0x138] sm:$0xff]
    %v465 = vld [vmem:[#allocation9 + $0x140] sm:$0xff]
    %v466 = vld [vmem:[#allocation9 + $0x148] sm:$0xff]
    %v467 = vld [vmem:[#allocation9 + $0x150] sm:$0xff]
    %v468 = vld [vmem:[#allocation9 + $0x158] sm:$0xff]
    %v469 = vld [vmem:[#allocation9 + $0x160] sm:$0xff]
    %v470 = vld [vmem:[#allocation9 + $0x168] sm:$0xff]
    %v471 = vld [vmem:[#allocation9 + $0x170] sm:$0xff]
    %v472 = vld [vmem:[#allocation9 + $0x178] sm:$0xff]
    %v473 = vld [vmem:[%s8] sm:$0x7]
    %v475 = vlaneseq
    %v476 = vshrl.u32 %v475, 7
    %v477 = vsub.s32 0, %v476
    %v478 = vrot.slane %v473, %v477
    %v479 = vlaneseq
    %v480 = vshrl.u32 %v479, 7
    %v481 = vsub.s32 1, %v480
    %v482 = vrot.slane %v473, %v481
    %v483 = vlaneseq
    %v484 = vshrl.u32 %v483, 7
    %v485 = vsub.s32 2, %v484
    %v486 = vrot.slane %v473, %v485
    %490 = vmatprep.subr.mxu0 %v426
    %491 = vmatpush1.msra.mxu0 %v425
    %492 = vmatprep.subr.mxu0 %v429
    %493 = vmatpush1.msra.mxu0 %v428
    %494 = vmatprep.subr.mxu0 %v432
    %495 = vmatpush1.msra.mxu0 %v431
    %496 = vmatprep.subr.mxu0 %v435
    %497 = vmatpush1.msra.mxu0 %v434
    %498 = vmatprep.subr.mxu0 %v438
    %499 = vmatpush1.msra.mxu0 %v437
    %500 = vmatprep.subr.mxu0 %v441
    %501 = vmatpush1.msra.mxu0 %v440
    %502 = vmatprep.subr.mxu0 %v444
    %503 = vmatpush1.msra.mxu0 %v443
    %504 = vmatprep.subr.mxu0 %v447
    %505 = vmatpush1.msra.mxu0 %v446
    %506 = vmatprep.subr.mxu0 %v450
    %507 = vmatpush1.msra.mxu0 %v449
    %508 = vmatprep.subr.mxu0 %v453
    %509 = vmatpush1.msra.mxu0 %v452
    %510 = vmatprep.subr.mxu0 %v456
    %511 = vmatpush1.msra.mxu0 %v455
    %512 = vmatprep.subr.mxu0 %v459
    %513 = vmatpush1.msra.mxu0 %v458
    %514 = vmatprep.subr.mxu0 %v462
    %515 = vmatpush1.msra.mxu0 %v461
    %516 = vmatprep.subr.mxu0 %v465
    %517 = vmatpush1.msra.mxu0 %v464
    %518 = vmatprep.subr.mxu0 %v468
    %519 = vmatpush1.msra.mxu0 %v467
    %520 = vmatprep.subr.mxu0 %v471
    %521 = vmatpush1.msra.mxu0 %v470
    %522 = vmatprep.subr.mxu0 0.0
    %523 = vmatpush1.msra.mxu0 0.0
    %524 = vmatprep.subr.mxu0 0.0
    %525 = vmatpush1.msra.mxu0 0.0
    %526 = vmatprep.subr.mxu0 0.0
    %527 = vmatpush1.msra.mxu0 0.0
    %528 = vmatprep.subr.mxu0 0.0
    %529 = vmatpush1.msra.mxu0 0.0
    %530 = vmatprep.subr.mxu0 0.0
    %531 = vmatpush1.msra.mxu0 0.0
    %532 = vmatprep.subr.mxu0 0.0
    %533 = vmatpush1.msra.mxu0 0.0
    %534 = vmatprep.subr.mxu0 0.0
    %535 = vmatpush1.msra.mxu0 0.0
    %536 = vmatprep.subr.mxu0 0.0
    %537 = vmatpush1.msra.mxu0 0.0
    %538 = vmatprep.subr.mxu0 0.0
    %539 = vmatpush1.msra.mxu0 0.0
    %540 = vmatprep.subr.mxu0 0.0
    %541 = vmatpush1.msra.mxu0 0.0
    %542 = vmatprep.subr.mxu0 0.0
    %543 = vmatpush1.msra.mxu0 0.0
    %544 = vmatprep.subr.mxu0 0.0
    %545 = vmatpush1.msra.mxu0 0.0
    %546 = vmatprep.subr.mxu0 0.0
    %547 = vmatpush1.msra.mxu0 0.0
    %548 = vmatprep.subr.mxu0 0.0
    %549 = vmatpush1.msra.mxu0 0.0
    %550 = vmatprep.subr.mxu0 0.0
    %551 = vmatpush1.msra.mxu0 0.0
    %552 = vmatprep.subr.mxu0 0.0
    %553 = vmatpush1.msra.mxu0 0.0
    %554 = vmatprep.mubr.f32.mxu0 0.0
    %555 = vmatmul.mubr.f32.gmra.mrb[0].mxu0 %v422
    %v556 = vpop.f32.mrb[0].mxu0
    %v557 = vadd.f32 %v478, %v556
    %v558 = vpop.f32.mrb[0].mxu0
    %v559 = vadd.f32 %v482, %v558
    %560 = vdwg.mxu0
    %561 = vmatprep.subr.mxu0 0.0
    %562 = vmatpush1.msra.mxu0 %v427
    %563 = vmatprep.subr.mxu0 0.0
    %564 = vmatpush1.msra.mxu0 %v430
    %565 = vmatprep.subr.mxu0 0.0
    %566 = vmatpush1.msra.mxu0 %v433
    %567 = vmatprep.subr.mxu0 0.0
    %568 = vmatpush1.msra.mxu0 %v436
    %569 = vmatprep.subr.mxu0 0.0
    %570 = vmatpush1.msra.mxu0 %v439
    %571 = vmatprep.subr.mxu0 0.0
    %572 = vmatpush1.msra.mxu0 %v442
    %573 = vmatprep.subr.mxu0 0.0
    %574 = vmatpush1.msra.mxu0 %v445
    %575 = vmatprep.subr.mxu0 0.0
    %576 = vmatpush1.msra.mxu0 %v448
    %577 = vmatprep.subr.mxu0 0.0
    %578 = vmatpush1.msra.mxu0 %v451
    %579 = vmatprep.subr.mxu0 0.0
    %580 = vmatpush1.msra.mxu0 %v454
    %581 = vmatprep.subr.mxu0 0.0
    %582 = vmatpush1.msra.mxu0 %v457
    %583 = vmatprep.subr.mxu0 0.0
    %584 = vmatpush1.msra.mxu0 %v460
    %585 = vmatprep.subr.mxu0 0.0
    %586 = vmatpush1.msra.mxu0 %v463
    %587 = vmatprep.subr.mxu0 0.0
    %588 = vmatpush1.msra.mxu0 %v466
    %589 = vmatprep.subr.mxu0 0.0
    %590 = vmatpush1.msra.mxu0 %v469
    %591 = vmatprep.subr.mxu0 0.0
    %592 = vmatpush1.msra.mxu0 %v472
    %593 = vmatprep.subr.mxu0 0.0
    %594 = vmatpush1.msra.mxu0 0.0
    %595 = vmatprep.subr.mxu0 0.0
    %596 = vmatpush1.msra.mxu0 0.0
    %597 = vmatprep.subr.mxu0 0.0
    %598 = vmatpush1.msra.mxu0 0.0
    %599 = vmatprep.subr.mxu0 0.0
    %600 = vmatpush1.msra.mxu0 0.0
    %601 = vmatprep.subr.mxu0 0.0
    %602 = vmatpush1.msra.mxu0 0.0
    %603 = vmatprep.subr.mxu0 0.0
    %604 = vmatpush1.msra.mxu0 0.0
    %605 = vmatprep.subr.mxu0 0.0
    %606 = vmatpush1.msra.mxu0 0.0
    %607 = vmatprep.subr.mxu0 0.0
    %608 = vmatpush1.msra.mxu0 0.0
    %609 = vmatprep.subr.mxu0 0.0
    %610 = vmatpush1.msra.mxu0 0.0
    %611 = vmatprep.subr.mxu0 0.0
    %612 = vmatpush1.msra.mxu0 0.0
    %613 = vmatprep.subr.mxu0 0.0
    %614 = vmatpush1.msra.mxu0 0.0
    %615 = vmatprep.subr.mxu0 0.0
    %616 = vmatpush1.msra.mxu0 0.0
    %617 = vmatprep.subr.mxu0 0.0
    %618 = vmatpush1.msra.mxu0 0.0
    %619 = vmatprep.subr.mxu0 0.0
    %620 = vmatpush1.msra.mxu0 0.0
    %621 = vmatprep.subr.mxu0 0.0
    %622 = vmatpush1.msra.mxu0 0.0
    %623 = vmatprep.subr.mxu0 0.0
    %624 = vmatpush1.msra.mxu0 0.0
    %625 = vmatprep.mubr.f32.mxu0 0.0
    %626 = vmatmul.mubr.f32.gmra.mrb[0].mxu0 %v422
    %v627 = vpop.f32.mrb[0].mxu0
    %v628 = vadd.f32 %v486, %v627
    %v629 = vpop.f32.mrb[0].mxu0
    %630 = vdwg.mxu0
    %631 = vst [vmem:[%s13] sm:$0x3] %v559
    %v632 = vld [vmem:[#allocation10] sm:$0xff]
    %v633 = vld [vmem:[#allocation10 + $0x8] sm:$0xff]
    %v634 = vld [vmem:[#allocation10 + $0x10] sm:$0xff]
    %v635 = vld [vmem:[#allocation10 + $0x18] sm:$0xff]
    %v636 = vld [vmem:[#allocation10 + $0x20] sm:$0xff]
    %v637 = vld [vmem:[#allocation10 + $0x28] sm:$0xff]
    %v638 = vld [vmem:[#allocation10 + $0x30] sm:$0xff]
    %v639 = vld [vmem:[#allocation10 + $0x38] sm:$0xff]
    %v640 = vld [vmem:[#allocation10 + $0x40] sm:$0xff]
    %v641 = vld [vmem:[#allocation10 + $0x48] sm:$0xff]
    %v642 = vld [vmem:[#allocation10 + $0x50] sm:$0xff]
    %v643 = vld [vmem:[#allocation10 + $0x58] sm:$0xff]
    %v644 = vld [vmem:[#allocation10 + $0x60] sm:$0xff]
    %v645 = vld [vmem:[#allocation10 + $0x68] sm:$0xff]
    %v646 = vld [vmem:[#allocation10 + $0x70] sm:$0xff]
    %v647 = vld [vmem:[#allocation10 + $0x78] sm:$0xff]
    %v648 = vld [vmem:[#allocation10 + $0x80] sm:$0xff]
    %v649 = vld [vmem:[#allocation10 + $0x88] sm:$0xff]
    %v650 = vld [vmem:[#allocation10 + $0x90] sm:$0xff]
    %v651 = vld [vmem:[#allocation10 + $0x98] sm:$0xff]
    %v652 = vld [vmem:[#allocation10 + $0xa0] sm:$0xff]
    %v653 = vld [vmem:[#allocation10 + $0xa8] sm:$0xff]
    %v654 = vld [vmem:[#allocation10 + $0xb0] sm:$0xff]
    %v655 = vld [vmem:[#allocation10 + $0xb8] sm:$0xff]
    %v656 = vld [vmem:[#allocation10 + $0xc0] sm:$0xff]
    %v657 = vld [vmem:[#allocation10 + $0xc8] sm:$0xff]
    %v658 = vld [vmem:[#allocation10 + $0xd0] sm:$0xff]
    %v659 = vld [vmem:[#allocation10 + $0xd8] sm:$0xff]
    %v660 = vld [vmem:[#allocation10 + $0xe0] sm:$0xff]
    %v661 = vld [vmem:[#allocation10 + $0xe8] sm:$0xff]
    %v662 = vld [vmem:[#allocation10 + $0xf0] sm:$0xff]
    %v663 = vld [vmem:[#allocation10 + $0xf8] sm:$0xff]
    %v664 = vld [vmem:[#allocation10 + $0x100] sm:$0xff]
    %v665 = vld [vmem:[#allocation10 + $0x108] sm:$0xff]
    %v666 = vld [vmem:[#allocation10 + $0x110] sm:$0xff]
    %v667 = vld [vmem:[#allocation10 + $0x118] sm:$0xff]
    %v668 = vld [vmem:[#allocation10 + $0x120] sm:$0xff]
    %v669 = vld [vmem:[#allocation10 + $0x128] sm:$0xff]
    %v670 = vld [vmem:[#allocation10 + $0x130] sm:$0xff]
    %v671 = vld [vmem:[#allocation10 + $0x138] sm:$0xff]
    %v672 = vld [vmem:[#allocation10 + $0x140] sm:$0xff]
    %v673 = vld [vmem:[#allocation10 + $0x148] sm:$0xff]
    %v674 = vld [vmem:[#allocation10 + $0x150] sm:$0xff]
    %v675 = vld [vmem:[#allocation10 + $0x158] sm:$0xff]
    %v676 = vld [vmem:[#allocation10 + $0x160] sm:$0xff]
    %v677 = vld [vmem:[#allocation10 + $0x168] sm:$0xff]
    %v678 = vld [vmem:[#allocation10 + $0x170] sm:$0xff]
    %v679 = vld [vmem:[#allocation10 + $0x178] sm:$0xff]
    %v680 = vld [vmem:[#allocation10 + $0x180] sm:$0xff]
    %v681 = vld [vmem:[#allocation10 + $0x188] sm:$0xff]
    %v682 = vld [vmem:[#allocation10 + $0x190] sm:$0xff]
    %v683 = vld [vmem:[#allocation10 + $0x198] sm:$0xff]
    %v684 = vld [vmem:[#allocation10 + $0x1a0] sm:$0xff]
    %v685 = vld [vmem:[#allocation10 + $0x1a8] sm:$0xff]
    %v686 = vld [vmem:[#allocation10 + $0x1b0] sm:$0xff]
    %v687 = vld [vmem:[#allocation10 + $0x1b8] sm:$0xff]
    %v688 = vld [vmem:[#allocation10 + $0x1c0] sm:$0xff]
    %v689 = vld [vmem:[#allocation10 + $0x1c8] sm:$0xff]
    %v690 = vld [vmem:[#allocation10 + $0x1d0] sm:$0xff]
    %v691 = vld [vmem:[#allocation10 + $0x1d8] sm:$0xff]
    %v692 = vld [vmem:[#allocation10 + $0x1e0] sm:$0xff]
    %v693 = vld [vmem:[#allocation10 + $0x1e8] sm:$0xff]
    %v694 = vld [vmem:[#allocation10 + $0x1f0] sm:$0xff]
    %v695 = vld [vmem:[#allocation10 + $0x1f8] sm:$0xff]
    %v696 = vld [vmem:[#allocation10 + $0x200] sm:$0xff]
    %v697 = vld [vmem:[#allocation10 + $0x208] sm:$0xff]
    %v698 = vld [vmem:[#allocation10 + $0x210] sm:$0xff]
    %v699 = vld [vmem:[#allocation10 + $0x218] sm:$0xff]
    %v700 = vld [vmem:[#allocation10 + $0x220] sm:$0xff]
    %v701 = vld [vmem:[#allocation10 + $0x228] sm:$0xff]
    %v702 = vld [vmem:[#allocation10 + $0x230] sm:$0xff]
    %v703 = vld [vmem:[#allocation10 + $0x238] sm:$0xff]
    %v704 = vld [vmem:[#allocation10 + $0x240] sm:$0xff]
    %v705 = vld [vmem:[#allocation10 + $0x248] sm:$0xff]
    %v706 = vld [vmem:[#allocation10 + $0x250] sm:$0xff]
    %v707 = vld [vmem:[#allocation10 + $0x258] sm:$0xff]
    %v708 = vld [vmem:[#allocation10 + $0x260] sm:$0xff]
    %v709 = vld [vmem:[#allocation10 + $0x268] sm:$0xff]
    %v710 = vld [vmem:[#allocation10 + $0x270] sm:$0xff]
    %v711 = vld [vmem:[#allocation10 + $0x278] sm:$0xff]
    %v712 = vld [vmem:[#allocation10 + $0x280] sm:$0xff]
    %v713 = vld [vmem:[#allocation10 + $0x288] sm:$0xff]
    %v714 = vld [vmem:[#allocation10 + $0x290] sm:$0xff]
    %v715 = vld [vmem:[#allocation10 + $0x298] sm:$0xff]
    %v716 = vld [vmem:[#allocation10 + $0x2a0] sm:$0xff]
    %v717 = vld [vmem:[#allocation10 + $0x2a8] sm:$0xff]
    %v718 = vld [vmem:[#allocation10 + $0x2b0] sm:$0xff]
    %v719 = vld [vmem:[#allocation10 + $0x2b8] sm:$0xff]
    %v720 = vld [vmem:[#allocation10 + $0x2c0] sm:$0xff]
    %v721 = vld [vmem:[#allocation10 + $0x2c8] sm:$0xff]
    %v722 = vld [vmem:[#allocation10 + $0x2d0] sm:$0xff]
    %v723 = vld [vmem:[#allocation10 + $0x2d8] sm:$0xff]
    %v724 = vld [vmem:[#allocation10 + $0x2e0] sm:$0xff]
    %v725 = vld [vmem:[#allocation10 + $0x2e8] sm:$0xff]
    %v726 = vld [vmem:[#allocation10 + $0x2f0] sm:$0xff]
    %v727 = vld [vmem:[#allocation10 + $0x2f8] sm:$0xff]
    %v728 = vld [vmem:[#allocation10 + $0x300] sm:$0xff]
    %v729 = vld [vmem:[#allocation10 + $0x308] sm:$0xff]
    %v730 = vld [vmem:[#allocation10 + $0x310] sm:$0xff]
    %v731 = vld [vmem:[#allocation10 + $0x318] sm:$0xff]
    %v732 = vld [vmem:[#allocation10 + $0x320] sm:$0xff]
    %v733 = vld [vmem:[#allocation10 + $0x328] sm:$0xff]
    %v734 = vld [vmem:[#allocation10 + $0x330] sm:$0xff]
    %v735 = vld [vmem:[#allocation10 + $0x338] sm:$0xff]
    %v736 = vld [vmem:[#allocation10 + $0x340] sm:$0xff]
    %v737 = vld [vmem:[#allocation10 + $0x348] sm:$0xff]
    %v738 = vld [vmem:[#allocation10 + $0x350] sm:$0xff]
    %v739 = vld [vmem:[#allocation10 + $0x358] sm:$0xff]
    %v740 = vld [vmem:[#allocation10 + $0x360] sm:$0xff]
    %v741 = vld [vmem:[#allocation10 + $0x368] sm:$0xff]
    %v742 = vld [vmem:[#allocation10 + $0x370] sm:$0xff]
    %v743 = vld [vmem:[#allocation10 + $0x378] sm:$0xff]
    %v744 = vld [vmem:[#allocation10 + $0x380] sm:$0xff]
    %v745 = vld [vmem:[#allocation10 + $0x388] sm:$0xff]
    %v746 = vld [vmem:[#allocation10 + $0x390] sm:$0xff]
    %v747 = vld [vmem:[#allocation10 + $0x398] sm:$0xff]
    %v748 = vld [vmem:[#allocation10 + $0x3a0] sm:$0xff]
    %v749 = vld [vmem:[#allocation10 + $0x3a8] sm:$0xff]
    %v750 = vld [vmem:[#allocation10 + $0x3b0] sm:$0xff]
    %v751 = vld [vmem:[#allocation10 + $0x3b8] sm:$0xff]
    %v752 = vld [vmem:[#allocation10 + $0x3c0] sm:$0xff]
    %v753 = vld [vmem:[#allocation10 + $0x3c8] sm:$0xff]
    %v754 = vld [vmem:[#allocation10 + $0x3d0] sm:$0xff]
    %v755 = vld [vmem:[#allocation10 + $0x3d8] sm:$0xff]
    %v756 = vld [vmem:[#allocation10 + $0x3e0] sm:$0xff]
    %v757 = vld [vmem:[#allocation10 + $0x3e8] sm:$0xff]
    %v758 = vld [vmem:[#allocation10 + $0x3f0] sm:$0xff]
    %v759 = vld [vmem:[#allocation10 + $0x3f8] sm:$0xff]
    %760 = vmatprep.subr.mxu0 %v633
    %761 = vmatpush1.msra.mxu0 %v632
    %762 = vmatprep.subr.mxu0 %v641
    %763 = vmatpush1.msra.mxu0 %v640
    %764 = vmatprep.subr.mxu0 %v649
    %765 = vmatpush1.msra.mxu0 %v648
    %766 = vmatprep.subr.mxu0 %v657
    %767 = vmatpush1.msra.mxu0 %v656
    %768 = vmatprep.subr.mxu0 %v665
    %769 = vmatpush1.msra.mxu0 %v664
    %770 = vmatprep.subr.mxu0 %v673
    %771 = vmatpush1.msra.mxu0 %v672
    %772 = vmatprep.subr.mxu0 %v681
    %773 = vmatpush1.msra.mxu0 %v680
    %774 = vmatprep.subr.mxu0 %v689
    %775 = vmatpush1.msra.mxu0 %v688
    %776 = vmatprep.subr.mxu0 %v697
    %777 = vmatpush1.msra.mxu0 %v696
    %778 = vmatprep.subr.mxu0 %v705
    %779 = vmatpush1.msra.mxu0 %v704
    %780 = vmatprep.subr.mxu0 %v713
    %781 = vmatpush1.msra.mxu0 %v712
    %782 = vmatprep.subr.mxu0 %v721
    %783 = vmatpush1.msra.mxu0 %v720
    %784 = vmatprep.subr.mxu0 %v729
    %785 = vmatpush1.msra.mxu0 %v728
    %786 = vmatprep.subr.mxu0 %v737
    %787 = vmatpush1.msra.mxu0 %v736
    %788 = vmatprep.subr.mxu0 %v745
    %789 = vmatpush1.msra.mxu0 %v744
    %790 = vmatprep.subr.mxu0 %v753
    %791 = vmatpush1.msra.mxu0 %v752
    %792 = vmatprep.subr.mxu0 0.0
    %793 = vmatpush1.msra.mxu0 0.0
    %794 = vmatprep.subr.mxu0 0.0
    %795 = vmatpush1.msra.mxu0 0.0
    %796 = vmatprep.subr.mxu0 0.0
    %797 = vmatpush1.msra.mxu0 0.0
    %798 = vmatprep.subr.mxu0 0.0
    %799 = vmatpush1.msra.mxu0 0.0
    %800 = vmatprep.subr.mxu0 0.0
    %801 = vmatpush1.msra.mxu0 0.0
    %802 = vmatprep.subr.mxu0 0.0
    %803 = vmatpush1.msra.mxu0 0.0
    %804 = vmatprep.subr.mxu0 0.0
    %805 = vmatpush1.msra.mxu0 0.0
    %806 = vmatprep.subr.mxu0 0.0
    %807 = vmatpush1.msra.mxu0 0.0
    %808 = vmatprep.subr.mxu0 0.0
    %809 = vmatpush1.msra.mxu0 0.0
    %810 = vmatprep.subr.mxu0 0.0
    %811 = vmatpush1.msra.mxu0 0.0
    %812 = vmatprep.subr.mxu0 0.0
    %813 = vmatpush1.msra.mxu0 0.0
    %814 = vmatprep.subr.mxu0 0.0
    %815 = vmatpush1.msra.mxu0 0.0
    %816 = vmatprep.subr.mxu0 0.0
    %817 = vmatpush1.msra.mxu0 0.0
    %818 = vmatprep.subr.mxu0 0.0
    %819 = vmatpush1.msra.mxu0 0.0
    %820 = vmatprep.subr.mxu0 0.0
    %821 = vmatpush1.msra.mxu0 0.0
    %822 = vmatprep.subr.mxu0 0.0
    %823 = vmatpush1.msra.mxu0 0.0
    %824 = vmatprep.mubr.f32.mxu0 0.0
    %825 = vmatmul.mubr.f32.gmra.mrb[0].mxu0 %v557
    %v826 = vpop.f32.mrb[0].mxu0
    %v827 = vadd.f32 0.0, %v826
    %v828 = vpop.f32.mrb[0].mxu0
    %v829 = vadd.f32 0.0, %v828
    %830 = vdwg.mxu0
    %831 = vmatprep.subr.mxu0 %v635
    %832 = vmatpush1.msra.mxu0 %v634
    %833 = vmatprep.subr.mxu0 %v643
    %834 = vmatpush1.msra.mxu0 %v642
    %835 = vmatprep.subr.mxu0 %v651
    %836 = vmatpush1.msra.mxu0 %v650
    %837 = vmatprep.subr.mxu0 %v659
    %838 = vmatpush1.msra.mxu0 %v658
    %839 = vmatprep.subr.mxu0 %v667
    %840 = vmatpush1.msra.mxu0 %v666
    %841 = vmatprep.subr.mxu0 %v675
    %842 = vmatpush1.msra.mxu0 %v674
    %843 = vmatprep.subr.mxu0 %v683
    %844 = vmatpush1.msra.mxu0 %v682
    %845 = vmatprep.subr.mxu0 %v691
    %846 = vmatpush1.msra.mxu0 %v690
    %847 = vmatprep.subr.mxu0 %v699
    %848 = vmatpush1.msra.mxu0 %v698
    %849 = vmatprep.subr.mxu0 %v707
    %850 = vmatpush1.msra.mxu0 %v706
    %851 = vmatprep.subr.mxu0 %v715
    %852 = vmatpush1.msra.mxu0 %v714
    %853 = vmatprep.subr.mxu0 %v723
    %854 = vmatpush1.msra.mxu0 %v722
    %855 = vmatprep.subr.mxu0 %v731
    %856 = vmatpush1.msra.mxu0 %v730
    %857 = vmatprep.subr.mxu0 %v739
    %858 = vmatpush1.msra.mxu0 %v738
    %859 = vmatprep.subr.mxu0 %v747
    %860 = vmatpush1.msra.mxu0 %v746
    %861 = vmatprep.subr.mxu0 %v755
    %862 = vmatpush1.msra.mxu0 %v754
    %863 = vmatprep.subr.mxu0 0.0
    %864 = vmatpush1.msra.mxu0 0.0
    %865 = vmatprep.subr.mxu0 0.0
    %866 = vmatpush1.msra.mxu0 0.0
    %867 = vmatprep.subr.mxu0 0.0
    %868 = vmatpush1.msra.mxu0 0.0
    %869 = vmatprep.subr.mxu0 0.0
    %870 = vmatpush1.msra.mxu0 0.0
    %871 = vmatprep.subr.mxu0 0.0
    %872 = vmatpush1.msra.mxu0 0.0
    %873 = vmatprep.subr.mxu0 0.0
    %874 = vmatpush1.msra.mxu0 0.0
    %875 = vmatprep.subr.mxu0 0.0
    %876 = vmatpush1.msra.mxu0 0.0
    %877 = vmatprep.subr.mxu0 0.0
    %878 = vmatpush1.msra.mxu0 0.0
    %879 = vmatprep.subr.mxu0 0.0
    %880 = vmatpush1.msra.mxu0 0.0
    %881 = vmatprep.subr.mxu0 0.0
    %882 = vmatpush1.msra.mxu0 0.0
    %883 = vmatprep.subr.mxu0 0.0
    %884 = vmatpush1.msra.mxu0 0.0
    %885 = vmatprep.subr.mxu0 0.0
    %886 = vmatpush1.msra.mxu0 0.0
    %887 = vmatprep.subr.mxu0 0.0
    %888 = vmatpush1.msra.mxu0 0.0
    %889 = vmatprep.subr.mxu0 0.0
    %890 = vmatpush1.msra.mxu0 0.0
    %891 = vmatprep.subr.mxu0 0.0
    %892 = vmatpush1.msra.mxu0 0.0
    %893 = vmatprep.subr.mxu0 0.0
    %894 = vmatpush1.msra.mxu0 0.0
    %895 = vmatprep.mubr.f32.mxu0 0.0
    %896 = vmatmul.mubr.f32.gmra.mrb[0].mxu0 %v557
    %v897 = vpop.f32.mrb[0].mxu0
    %v898 = vadd.f32 0.0, %v897
    %v899 = vpop.f32.mrb[0].mxu0
    %v900 = vadd.f32 0.0, %v899
    %901 = vdwg.mxu0
    %902 = vmatprep.subr.mxu0 %v637
    %903 = vmatpush1.msra.mxu0 %v636
    %904 = vmatprep.subr.mxu0 %v645
    %905 = vmatpush1.msra.mxu0 %v644
    %906 = vmatprep.subr.mxu0 %v653
    %907 = vmatpush1.msra.mxu0 %v652
    %908 = vmatprep.subr.mxu0 %v661
    %909 = vmatpush1.msra.mxu0 %v660
    %910 = vmatprep.subr.mxu0 %v669
    %911 = vmatpush1.msra.mxu0 %v668
    %912 = vmatprep.subr.mxu0 %v677
    %913 = vmatpush1.msra.mxu0 %v676
    %914 = vmatprep.subr.mxu0 %v685
    %915 = vmatpush1.msra.mxu0 %v684
    %916 = vmatprep.subr.mxu0 %v693
    %917 = vmatpush1.msra.mxu0 %v692
    %918 = vmatprep.subr.mxu0 %v701
    %919 = vmatpush1.msra.mxu0 %v700
    %920 = vmatprep.subr.mxu0 %v709
    %921 = vmatpush1.msra.mxu0 %v708
    %922 = vmatprep.subr.mxu0 %v717
    %923 = vmatpush1.msra.mxu0 %v716
    %924 = vmatprep.subr.mxu0 %v725
    %925 = vmatpush1.msra.mxu0 %v724
    %926 = vmatprep.subr.mxu0 %v733
    %927 = vmatpush1.msra.mxu0 %v732
    %928 = vmatprep.subr.mxu0 %v741
    %929 = vmatpush1.msra.mxu0 %v740
    %930 = vmatprep.subr.mxu0 %v749
    %931 = vmatpush1.msra.mxu0 %v748
    %932 = vmatprep.subr.mxu0 %v757
    %933 = vmatpush1.msra.mxu0 %v756
    %934 = vmatprep.subr.mxu0 0.0
    %935 = vmatpush1.msra.mxu0 0.0
    %936 = vmatprep.subr.mxu0 0.0
    %937 = vmatpush1.msra.mxu0 0.0
    %938 = vmatprep.subr.mxu0 0.0
    %939 = vmatpush1.msra.mxu0 0.0
    %940 = vmatprep.subr.mxu0 0.0
    %941 = vmatpush1.msra.mxu0 0.0
    %942 = vmatprep.subr.mxu0 0.0
    %943 = vmatpush1.msra.mxu0 0.0
    %944 = vmatprep.subr.mxu0 0.0
    %945 = vmatpush1.msra.mxu0 0.0
    %946 = vmatprep.subr.mxu0 0.0
    %947 = vmatpush1.msra.mxu0 0.0
    %948 = vmatprep.subr.mxu0 0.0
    %949 = vmatpush1.msra.mxu0 0.0
    %950 = vmatprep.subr.mxu0 0.0
    %951 = vmatpush1.msra.mxu0 0.0
    %952 = vmatprep.subr.mxu0 0.0
    %953 = vmatpush1.msra.mxu0 0.0
    %954 = vmatprep.subr.mxu0 0.0
    %955 = vmatpush1.msra.mxu0 0.0
    %956 = vmatprep.subr.mxu0 0.0
    %957 = vmatpush1.msra.mxu0 0.0
    %958 = vmatprep.subr.mxu0 0.0
    %959 = vmatpush1.msra.mxu0 0.0
    %960 = vmatprep.subr.mxu0 0.0
    %961 = vmatpush1.msra.mxu0 0.0
    %962 = vmatprep.subr.mxu0 0.0
    %963 = vmatpush1.msra.mxu0 0.0
    %964 = vmatprep.subr.mxu0 0.0
    %965 = vmatpush1.msra.mxu0 0.0
    %966 = vmatprep.mubr.f32.mxu0 0.0
    %967 = vmatmul.mubr.f32.gmra.mrb[0].mxu0 %v557
    %v968 = vpop.f32.mrb[0].mxu0
    %v969 = vadd.f32 0.0, %v968
    %v970 = vpop.f32.mrb[0].mxu0
    %v971 = vadd.f32 0.0, %v970
    %972 = vdwg.mxu0
    %973 = vmatprep.subr.mxu0 %v639
    %974 = vmatpush1.msra.mxu0 %v638
    %975 = vmatprep.subr.mxu0 %v647
    %976 = vmatpush1.msra.mxu0 %v646
    %977 = vmatprep.subr.mxu0 %v655
    %978 = vmatpush1.msra.mxu0 %v654
    %979 = vmatprep.subr.mxu0 %v663
    %980 = vmatpush1.msra.mxu0 %v662
    %981 = vmatprep.subr.mxu0 %v671
    %982 = vmatpush1.msra.mxu0 %v670
    %983 = vmatprep.subr.mxu0 %v679
    %984 = vmatpush1.msra.mxu0 %v678
    %985 = vmatprep.subr.mxu0 %v687
    %986 = vmatpush1.msra.mxu0 %v686
    %987 = vmatprep.subr.mxu0 %v695
    %988 = vmatpush1.msra.mxu0 %v694
    %989 = vmatprep.subr.mxu0 %v703
    %990 = vmatpush1.msra.mxu0 %v702
    %991 = vmatprep.subr.mxu0 %v711
    %992 = vmatpush1.msra.mxu0 %v710
    %993 = vmatprep.subr.mxu0 %v719
    %994 = vmatpush1.msra.mxu0 %v718
    %995 = vmatprep.subr.mxu0 %v727
    %996 = vmatpush1.msra.mxu0 %v726
    %997 = vmatprep.subr.mxu0 %v735
    %998 = vmatpush1.msra.mxu0 %v734
    %999 = vmatprep.subr.mxu0 %v743
    %1000 = vmatpush1.msra.mxu0 %v742
    %1001 = vmatprep.subr.mxu0 %v751
    %1002 = vmatpush1.msra.mxu0 %v750
    %1003 = vmatprep.subr.mxu0 %v759
    %1004 = vmatpush1.msra.mxu0 %v758
    %1005 = vmatprep.subr.mxu0 0.0
    %1006 = vmatpush1.msra.mxu0 0.0
    %1007 = vmatprep.subr.mxu0 0.0
    %1008 = vmatpush1.msra.mxu0 0.0
    %1009 = vmatprep.subr.mxu0 0.0
    %1010 = vmatpush1.msra.mxu0 0.0
    %1011 = vmatprep.subr.mxu0 0.0
    %1012 = vmatpush1.msra.mxu0 0.0
    %1013 = vmatprep.subr.mxu0 0.0
    %1014 = vmatpush1.msra.mxu0 0.0
    %1015 = vmatprep.subr.mxu0 0.0
    %1016 = vmatpush1.msra.mxu0 0.0
    %1017 = vmatprep.subr.mxu0 0.0
    %1018 = vmatpush1.msra.mxu0 0.0
    %1019 = vmatprep.subr.mxu0 0.0
    %1020 = vmatpush1.msra.mxu0 0.0
    %1021 = vmatprep.subr.mxu0 0.0
    %1022 = vmatpush1.msra.mxu0 0.0
    %1023 = vmatprep.subr.mxu0 0.0
    %1024 = vmatpush1.msra.mxu0 0.0
    %1025 = vmatprep.subr.mxu0 0.0
    %1026 = vmatpush1.msra.mxu0 0.0
    %1027 = vmatprep.subr.mxu0 0.0
    %1028 = vmatpush1.msra.mxu0 0.0
    %1029 = vmatprep.subr.mxu0 0.0
    %1030 = vmatpush1.msra.mxu0 0.0
    %1031 = vmatprep.subr.mxu0 0.0
    %1032 = vmatpush1.msra.mxu0 0.0
    %1033 = vmatprep.subr.mxu0 0.0
    %1034 = vmatpush1.msra.mxu0 0.0
    %1035 = vmatprep.subr.mxu0 0.0
    %1036 = vmatpush1.msra.mxu0 0.0
    %1037 = vmatprep.mubr.f32.mxu0 0.0
    %1038 = vmatmul.mubr.f32.gmra.mrb[0].mxu0 %v557
    %v1039 = vpop.f32.mrb[0].mxu0
    %v1040 = vadd.f32 0.0, %v1039
    %v1041 = vpop.f32.mrb[0].mxu0
    %v1042 = vadd.f32 0.0, %v1041
    %1043 = vdwg.mxu0
    %v1044 = vld [vmem:[#allocation12] sm:$0xff]
    %v1045 = vld [vmem:[#allocation12 + $0x8] sm:$0xff]
    %v1046 = vld [vmem:[#allocation12 + $0x10] sm:$0xff]
    %v1047 = vld [vmem:[#allocation12 + $0x18] sm:$0xff]
    %v1048 = vld [vmem:[#allocation12 + $0x20] sm:$0xff]
    %v1049 = vld [vmem:[#allocation12 + $0x28] sm:$0xff]
    %v1050 = vld [vmem:[#allocation12 + $0x30] sm:$0xff]
    %v1051 = vld [vmem:[#allocation12 + $0x38] sm:$0xff]
    %v1052 = vld [vmem:[#allocation12 + $0x40] sm:$0xff]
    %v1053 = vld [vmem:[#allocation12 + $0x48] sm:$0xff]
    %v1054 = vld [vmem:[#allocation12 + $0x50] sm:$0xff]
    %v1055 = vld [vmem:[#allocation12 + $0x58] sm:$0xff]
    %v1056 = vld [vmem:[#allocation12 + $0x60] sm:$0xff]
    %v1057 = vld [vmem:[#allocation12 + $0x68] sm:$0xff]
    %v1058 = vld [vmem:[#allocation12 + $0x70] sm:$0xff]
    %v1059 = vld [vmem:[#allocation12 + $0x78] sm:$0xff]
    %v1060 = vld [vmem:[#allocation12 + $0x80] sm:$0xff]
    %v1061 = vld [vmem:[#allocation12 + $0x88] sm:$0xff]
    %v1062 = vld [vmem:[#allocation12 + $0x90] sm:$0xff]
    %v1063 = vld [vmem:[#allocation12 + $0x98] sm:$0xff]
    %v1064 = vld [vmem:[#allocation12 + $0xa0] sm:$0xff]
    %v1065 = vld [vmem:[#allocation12 + $0xa8] sm:$0xff]
    %v1066 = vld [vmem:[#allocation12 + $0xb0] sm:$0xff]
    %v1067 = vld [vmem:[#allocation12 + $0xb8] sm:$0xff]
    %v1068 = vld [vmem:[#allocation12 + $0xc0] sm:$0xff]
    %v1069 = vld [vmem:[#allocation12 + $0xc8] sm:$0xff]
    %v1070 = vld [vmem:[#allocation12 + $0xd0] sm:$0xff]
    %v1071 = vld [vmem:[#allocation12 + $0xd8] sm:$0xff]
    %v1072 = vld [vmem:[#allocation12 + $0xe0] sm:$0xff]
    %v1073 = vld [vmem:[#allocation12 + $0xe8] sm:$0xff]
    %v1074 = vld [vmem:[#allocation12 + $0xf0] sm:$0xff]
    %v1075 = vld [vmem:[#allocation12 + $0xf8] sm:$0xff]
    %v1076 = vld [vmem:[#allocation12 + $0x100] sm:$0xff]
    %v1077 = vld [vmem:[#allocation12 + $0x108] sm:$0xff]
    %v1078 = vld [vmem:[#allocation12 + $0x110] sm:$0xff]
    %v1079 = vld [vmem:[#allocation12 + $0x118] sm:$0xff]
    %v1080 = vld [vmem:[#allocation12 + $0x120] sm:$0xff]
    %v1081 = vld [vmem:[#allocation12 + $0x128] sm:$0xff]
    %v1082 = vld [vmem:[#allocation12 + $0x130] sm:$0xff]
    %v1083 = vld [vmem:[#allocation12 + $0x138] sm:$0xff]
    %v1084 = vld [vmem:[#allocation12 + $0x140] sm:$0xff]
    %v1085 = vld [vmem:[#allocation12 + $0x148] sm:$0xff]
    %v1086 = vld [vmem:[#allocation12 + $0x150] sm:$0xff]
    %v1087 = vld [vmem:[#allocation12 + $0x158] sm:$0xff]
    %v1088 = vld [vmem:[#allocation12 + $0x160] sm:$0xff]
    %v1089 = vld [vmem:[#allocation12 + $0x168] sm:$0xff]
    %v1090 = vld [vmem:[#allocation12 + $0x170] sm:$0xff]
    %v1091 = vld [vmem:[#allocation12 + $0x178] sm:$0xff]
    %v1092 = vld [vmem:[#allocation12 + $0x180] sm:$0xff]
    %v1093 = vld [vmem:[#allocation12 + $0x188] sm:$0xff]
    %v1094 = vld [vmem:[#allocation12 + $0x190] sm:$0xff]
    %v1095 = vld [vmem:[#allocation12 + $0x198] sm:$0xff]
    %v1096 = vld [vmem:[#allocation12 + $0x1a0] sm:$0xff]
    %v1097 = vld [vmem:[#allocation12 + $0x1a8] sm:$0xff]
    %v1098 = vld [vmem:[#allocation12 + $0x1b0] sm:$0xff]
    %v1099 = vld [vmem:[#allocation12 + $0x1b8] sm:$0xff]
    %v1100 = vld [vmem:[#allocation12 + $0x1c0] sm:$0xff]
    %v1101 = vld [vmem:[#allocation12 + $0x1c8] sm:$0xff]
    %v1102 = vld [vmem:[#allocation12 + $0x1d0] sm:$0xff]
    %v1103 = vld [vmem:[#allocation12 + $0x1d8] sm:$0xff]
    %v1104 = vld [vmem:[#allocation12 + $0x1e0] sm:$0xff]
    %v1105 = vld [vmem:[#allocation12 + $0x1e8] sm:$0xff]
    %v1106 = vld [vmem:[#allocation12 + $0x1f0] sm:$0xff]
    %v1107 = vld [vmem:[#allocation12 + $0x1f8] sm:$0xff]
    %v1108 = vld [vmem:[#allocation12 + $0x200] sm:$0xff]
    %v1109 = vld [vmem:[#allocation12 + $0x208] sm:$0xff]
    %v1110 = vld [vmem:[#allocation12 + $0x210] sm:$0xff]
    %v1111 = vld [vmem:[#allocation12 + $0x218] sm:$0xff]
    %v1112 = vld [vmem:[#allocation12 + $0x220] sm:$0xff]
    %v1113 = vld [vmem:[#allocation12 + $0x228] sm:$0xff]
    %v1114 = vld [vmem:[#allocation12 + $0x230] sm:$0xff]
    %v1115 = vld [vmem:[#allocation12 + $0x238] sm:$0xff]
    %v1116 = vld [vmem:[#allocation12 + $0x240] sm:$0xff]
    %v1117 = vld [vmem:[#allocation12 + $0x248] sm:$0xff]
    %v1118 = vld [vmem:[#allocation12 + $0x250] sm:$0xff]
    %v1119 = vld [vmem:[#allocation12 + $0x258] sm:$0xff]
    %v1120 = vld [vmem:[#allocation12 + $0x260] sm:$0xff]
    %v1121 = vld [vmem:[#allocation12 + $0x268] sm:$0xff]
    %v1122 = vld [vmem:[#allocation12 + $0x270] sm:$0xff]
    %v1123 = vld [vmem:[#allocation12 + $0x278] sm:$0xff]
    %v1124 = vld [vmem:[#allocation12 + $0x280] sm:$0xff]
    %v1125 = vld [vmem:[#allocation12 + $0x288] sm:$0xff]
    %v1126 = vld [vmem:[#allocation12 + $0x290] sm:$0xff]
    %v1127 = vld [vmem:[#allocation12 + $0x298] sm:$0xff]
    %v1128 = vld [vmem:[#allocation12 + $0x2a0] sm:$0xff]
    %v1129 = vld [vmem:[#allocation12 + $0x2a8] sm:$0xff]
    %v1130 = vld [vmem:[#allocation12 + $0x2b0] sm:$0xff]
    %v1131 = vld [vmem:[#allocation12 + $0x2b8] sm:$0xff]
    %v1132 = vld [vmem:[#allocation12 + $0x2c0] sm:$0xff]
    %v1133 = vld [vmem:[#allocation12 + $0x2c8] sm:$0xff]
    %v1134 = vld [vmem:[#allocation12 + $0x2d0] sm:$0xff]
    %v1135 = vld [vmem:[#allocation12 + $0x2d8] sm:$0xff]
    %v1136 = vld [vmem:[#allocation12 + $0x2e0] sm:$0xff]
    %v1137 = vld [vmem:[#allocation12 + $0x2e8] sm:$0xff]
    %v1138 = vld [vmem:[#allocation12 + $0x2f0] sm:$0xff]
    %v1139 = vld [vmem:[#allocation12 + $0x2f8] sm:$0xff]
    %v1140 = vld [vmem:[#allocation12 + $0x300] sm:$0xff]
    %v1141 = vld [vmem:[#allocation12 + $0x308] sm:$0xff]
    %v1142 = vld [vmem:[#allocation12 + $0x310] sm:$0xff]
    %v1143 = vld [vmem:[#allocation12 + $0x318] sm:$0xff]
    %v1144 = vld [vmem:[#allocation12 + $0x320] sm:$0xff]
    %v1145 = vld [vmem:[#allocation12 + $0x328] sm:$0xff]
    %v1146 = vld [vmem:[#allocation12 + $0x330] sm:$0xff]
    %v1147 = vld [vmem:[#allocation12 + $0x338] sm:$0xff]
    %v1148 = vld [vmem:[#allocation12 + $0x340] sm:$0xff]
    %v1149 = vld [vmem:[#allocation12 + $0x348] sm:$0xff]
    %v1150 = vld [vmem:[#allocation12 + $0x350] sm:$0xff]
    %v1151 = vld [vmem:[#allocation12 + $0x358] sm:$0xff]
    %v1152 = vld [vmem:[#allocation12 + $0x360] sm:$0xff]
    %v1153 = vld [vmem:[#allocation12 + $0x368] sm:$0xff]
    %v1154 = vld [vmem:[#allocation12 + $0x370] sm:$0xff]
    %v1155 = vld [vmem:[#allocation12 + $0x378] sm:$0xff]
    %v1156 = vld [vmem:[#allocation12 + $0x380] sm:$0xff]
    %v1157 = vld [vmem:[#allocation12 + $0x388] sm:$0xff]
    %v1158 = vld [vmem:[#allocation12 + $0x390] sm:$0xff]
    %v1159 = vld [vmem:[#allocation12 + $0x398] sm:$0xff]
    %v1160 = vld [vmem:[#allocation12 + $0x3a0] sm:$0xff]
    %v1161 = vld [vmem:[#allocation12 + $0x3a8] sm:$0xff]
    %v1162 = vld [vmem:[#allocation12 + $0x3b0] sm:$0xff]
    %v1163 = vld [vmem:[#allocation12 + $0x3b8] sm:$0xff]
    %v1164 = vld [vmem:[#allocation12 + $0x3c0] sm:$0xff]
    %v1165 = vld [vmem:[#allocation12 + $0x3c8] sm:$0xff]
    %v1166 = vld [vmem:[#allocation12 + $0x3d0] sm:$0xff]
    %v1167 = vld [vmem:[#allocation12 + $0x3d8] sm:$0xff]
    %v1168 = vld [vmem:[#allocation12 + $0x3e0] sm:$0xff]
    %v1169 = vld [vmem:[#allocation12 + $0x3e8] sm:$0xff]
    %v1170 = vld [vmem:[#allocation12 + $0x3f0] sm:$0xff]
    %v1171 = vld [vmem:[#allocation12 + $0x3f8] sm:$0xff]
    %1172 = vmatprep.subr.mxu0 %v1045
    %1173 = vmatpush1.msra.mxu0 %v1044
    %1174 = vmatprep.subr.mxu0 %v1053
    %1175 = vmatpush1.msra.mxu0 %v1052
    %1176 = vmatprep.subr.mxu0 %v1061
    %1177 = vmatpush1.msra.mxu0 %v1060
    %1178 = vmatprep.subr.mxu0 %v1069
    %1179 = vmatpush1.msra.mxu0 %v1068
    %1180 = vmatprep.subr.mxu0 %v1077
    %1181 = vmatpush1.msra.mxu0 %v1076
    %1182 = vmatprep.subr.mxu0 %v1085
    %1183 = vmatpush1.msra.mxu0 %v1084
    %1184 = vmatprep.subr.mxu0 %v1093
    %1185 = vmatpush1.msra.mxu0 %v1092
    %1186 = vmatprep.subr.mxu0 %v1101
    %1187 = vmatpush1.msra.mxu0 %v1100
    %1188 = vmatprep.subr.mxu0 %v1109
    %1189 = vmatpush1.msra.mxu0 %v1108
    %1190 = vmatprep.subr.mxu0 %v1117
    %1191 = vmatpush1.msra.mxu0 %v1116
    %1192 = vmatprep.subr.mxu0 %v1125
    %1193 = vmatpush1.msra.mxu0 %v1124
    %1194 = vmatprep.subr.mxu0 %v1133
    %1195 = vmatpush1.msra.mxu0 %v1132
    %1196 = vmatprep.subr.mxu0 %v1141
    %1197 = vmatpush1.msra.mxu0 %v1140
    %1198 = vmatprep.subr.mxu0 %v1149
    %1199 = vmatpush1.msra.mxu0 %v1148
    %1200 = vmatprep.subr.mxu0 %v1157
    %1201 = vmatpush1.msra.mxu0 %v1156
    %1202 = vmatprep.subr.mxu0 %v1165
    %1203 = vmatpush1.msra.mxu0 %v1164
    %1204 = vmatprep.subr.mxu0 0.0
    %1205 = vmatpush1.msra.mxu0 0.0
    %1206 = vmatprep.subr.mxu0 0.0
    %1207 = vmatpush1.msra.mxu0 0.0
    %1208 = vmatprep.subr.mxu0 0.0
    %1209 = vmatpush1.msra.mxu0 0.0
    %1210 = vmatprep.subr.mxu0 0.0
    %1211 = vmatpush1.msra.mxu0 0.0
    %1212 = vmatprep.subr.mxu0 0.0
    %1213 = vmatpush1.msra.mxu0 0.0
    %1214 = vmatprep.subr.mxu0 0.0
    %1215 = vmatpush1.msra.mxu0 0.0
    %1216 = vmatprep.subr.mxu0 0.0
    %1217 = vmatpush1.msra.mxu0 0.0
    %1218 = vmatprep.subr.mxu0 0.0
    %1219 = vmatpush1.msra.mxu0 0.0
    %1220 = vmatprep.subr.mxu0 0.0
    %1221 = vmatpush1.msra.mxu0 0.0
    %1222 = vmatprep.subr.mxu0 0.0
    %1223 = vmatpush1.msra.mxu0 0.0
    %1224 = vmatprep.subr.mxu0 0.0
    %1225 = vmatpush1.msra.mxu0 0.0
    %1226 = vmatprep.subr.mxu0 0.0
    %1227 = vmatpush1.msra.mxu0 0.0
    %1228 = vmatprep.subr.mxu0 0.0
    %1229 = vmatpush1.msra.mxu0 0.0
    %1230 = vmatprep.subr.mxu0 0.0
    %1231 = vmatpush1.msra.mxu0 0.0
    %1232 = vmatprep.subr.mxu0 0.0
    %1233 = vmatpush1.msra.mxu0 0.0
    %1234 = vmatprep.subr.mxu0 0.0
    %1235 = vmatpush1.msra.mxu0 0.0
    %1236 = vmatprep.mubr.f32.mxu0 0.0
    %1237 = vmatmul.mubr.f32.gmra.mrb[0].mxu0 %v557
    %v1238 = vpop.f32.mrb[0].mxu0
    %v1239 = vadd.f32 0.0, %v1238
    %v1240 = vpop.f32.mrb[0].mxu0
    %v1241 = vadd.f32 0.0, %v1240
    %1242 = vdwg.mxu0
    %1243 = vmatprep.subr.mxu0 %v1047
    %1244 = vmatpush1.msra.mxu0 %v1046
    %1245 = vmatprep.subr.mxu0 %v1055
    %1246 = vmatpush1.msra.mxu0 %v1054
    %1247 = vmatprep.subr.mxu0 %v1063
    %1248 = vmatpush1.msra.mxu0 %v1062
    %1249 = vmatprep.subr.mxu0 %v1071
    %1250 = vmatpush1.msra.mxu0 %v1070
    %1251 = vmatprep.subr.mxu0 %v1079
    %1252 = vmatpush1.msra.mxu0 %v1078
    %1253 = vmatprep.subr.mxu0 %v1087
    %1254 = vmatpush1.msra.mxu0 %v1086
    %1255 = vmatprep.subr.mxu0 %v1095
    %1256 = vmatpush1.msra.mxu0 %v1094
    %1257 = vmatprep.subr.mxu0 %v1103
    %1258 = vmatpush1.msra.mxu0 %v1102
    %1259 = vmatprep.subr.mxu0 %v1111
    %1260 = vmatpush1.msra.mxu0 %v1110
    %1261 = vmatprep.subr.mxu0 %v1119
    %1262 = vmatpush1.msra.mxu0 %v1118
    %1263 = vmatprep.subr.mxu0 %v1127
    %1264 = vmatpush1.msra.mxu0 %v1126
    %1265 = vmatprep.subr.mxu0 %v1135
    %1266 = vmatpush1.msra.mxu0 %v1134
    %1267 = vmatprep.subr.mxu0 %v1143
    %1268 = vmatpush1.msra.mxu0 %v1142
    %1269 = vmatprep.subr.mxu0 %v1151
    %1270 = vmatpush1.msra.mxu0 %v1150
    %1271 = vmatprep.subr.mxu0 %v1159
    %1272 = vmatpush1.msra.mxu0 %v1158
    %1273 = vmatprep.subr.mxu0 %v1167
    %1274 = vmatpush1.msra.mxu0 %v1166
    %1275 = vmatprep.subr.mxu0 0.0
    %1276 = vmatpush1.msra.mxu0 0.0
    %1277 = vmatprep.subr.mxu0 0.0
    %1278 = vmatpush1.msra.mxu0 0.0
    %1279 = vmatprep.subr.mxu0 0.0
    %1280 = vmatpush1.msra.mxu0 0.0
    %1281 = vmatprep.subr.mxu0 0.0
    %1282 = vmatpush1.msra.mxu0 0.0
    %1283 = vmatprep.subr.mxu0 0.0
    %1284 = vmatpush1.msra.mxu0 0.0
    %1285 = vmatprep.subr.mxu0 0.0
    %1286 = vmatpush1.msra.mxu0 0.0
    %1287 = vmatprep.subr.mxu0 0.0
    %1288 = vmatpush1.msra.mxu0 0.0
    %1289 = vmatprep.subr.mxu0 0.0
    %1290 = vmatpush1.msra.mxu0 0.0
    %1291 = vmatprep.subr.mxu0 0.0
    %1292 = vmatpush1.msra.mxu0 0.0
    %1293 = vmatprep.subr.mxu0 0.0
    %1294 = vmatpush1.msra.mxu0 0.0
    %1295 = vmatprep.subr.mxu0 0.0
    %1296 = vmatpush1.msra.mxu0 0.0
    %1297 = vmatprep.subr.mxu0 0.0
    %1298 = vmatpush1.msra.mxu0 0.0
    %1299 = vmatprep.subr.mxu0 0.0
    %1300 = vmatpush1.msra.mxu0 0.0
    %1301 = vmatprep.subr.mxu0 0.0
    %1302 = vmatpush1.msra.mxu0 0.0
    %1303 = vmatprep.subr.mxu0 0.0
    %1304 = vmatpush1.msra.mxu0 0.0
    %1305 = vmatprep.subr.mxu0 0.0
    %1306 = vmatpush1.msra.mxu0 0.0
    %1307 = vmatprep.mubr.f32.mxu0 0.0
    %1308 = vmatmul.mubr.f32.gmra.mrb[0].mxu0 %v557
    %v1309 = vpop.f32.mrb[0].mxu0
    %v1310 = vadd.f32 0.0, %v1309
    %v1311 = vpop.f32.mrb[0].mxu0
    %v1312 = vadd.f32 0.0, %v1311
    %1313 = vdwg.mxu0
    %1314 = vmatprep.subr.mxu0 %v1049
    %1315 = vmatpush1.msra.mxu0 %v1048
    %1316 = vmatprep.subr.mxu0 %v1057
    %1317 = vmatpush1.msra.mxu0 %v1056
    %1318 = vmatprep.subr.mxu0 %v1065
    %1319 = vmatpush1.msra.mxu0 %v1064
    %1320 = vmatprep.subr.mxu0 %v1073
    %1321 = vmatpush1.msra.mxu0 %v1072
    %1322 = vmatprep.subr.mxu0 %v1081
    %1323 = vmatpush1.msra.mxu0 %v1080
    %1324 = vmatprep.subr.mxu0 %v1089
    %1325 = vmatpush1.msra.mxu0 %v1088
    %1326 = vmatprep.subr.mxu0 %v1097
    %1327 = vmatpush1.msra.mxu0 %v1096
    %1328 = vmatprep.subr.mxu0 %v1105
    %1329 = vmatpush1.msra.mxu0 %v1104
    %1330 = vmatprep.subr.mxu0 %v1113
    %1331 = vmatpush1.msra.mxu0 %v1112
    %1332 = vmatprep.subr.mxu0 %v1121
    %1333 = vmatpush1.msra.mxu0 %v1120
    %1334 = vmatprep.subr.mxu0 %v1129
    %1335 = vmatpush1.msra.mxu0 %v1128
    %1336 = vmatprep.subr.mxu0 %v1137
    %1337 = vmatpush1.msra.mxu0 %v1136
    %1338 = vmatprep.subr.mxu0 %v1145
    %1339 = vmatpush1.msra.mxu0 %v1144
    %1340 = vmatprep.subr.mxu0 %v1153
    %1341 = vmatpush1.msra.mxu0 %v1152
    %1342 = vmatprep.subr.mxu0 %v1161
    %1343 = vmatpush1.msra.mxu0 %v1160
    %1344 = vmatprep.subr.mxu0 %v1169
    %1345 = vmatpush1.msra.mxu0 %v1168
    %1346 = vmatprep.subr.mxu0 0.0
    %1347 = vmatpush1.msra.mxu0 0.0
    %1348 = vmatprep.subr.mxu0 0.0
    %1349 = vmatpush1.msra.mxu0 0.0
    %1350 = vmatprep.subr.mxu0 0.0
    %1351 = vmatpush1.msra.mxu0 0.0
    %1352 = vmatprep.subr.mxu0 0.0
    %1353 = vmatpush1.msra.mxu0 0.0
    %1354 = vmatprep.subr.mxu0 0.0
    %1355 = vmatpush1.msra.mxu0 0.0
    %1356 = vmatprep.subr.mxu0 0.0
    %1357 = vmatpush1.msra.mxu0 0.0
    %1358 = vmatprep.subr.mxu0 0.0
    %1359 = vmatpush1.msra.mxu0 0.0
    %1360 = vmatprep.subr.mxu0 0.0
    %1361 = vmatpush1.msra.mxu0 0.0
    %1362 = vmatprep.subr.mxu0 0.0
    %1363 = vmatpush1.msra.mxu0 0.0
    %1364 = vmatprep.subr.mxu0 0.0
    %1365 = vmatpush1.msra.mxu0 0.0
    %1366 = vmatprep.subr.mxu0 0.0
    %1367 = vmatpush1.msra.mxu0 0.0
    %1368 = vmatprep.subr.mxu0 0.0
    %1369 = vmatpush1.msra.mxu0 0.0
    %1370 = vmatprep.subr.mxu0 0.0
    %1371 = vmatpush1.msra.mxu0 0.0
    %1372 = vmatprep.subr.mxu0 0.0
    %1373 = vmatpush1.msra.mxu0 0.0
    %1374 = vmatprep.subr.mxu0 0.0
    %1375 = vmatpush1.msra.mxu0 0.0
    %1376 = vmatprep.subr.mxu0 0.0
    %1377 = vmatpush1.msra.mxu0 0.0
    %1378 = vmatprep.mubr.f32.mxu0 0.0
    %1379 = vmatmul.mubr.f32.gmra.mrb[0].mxu0 %v557
    %v1380 = vpop.f32.mrb[0].mxu0
    %v1381 = vadd.f32 0.0, %v1380
    %v1382 = vpop.f32.mrb[0].mxu0
    %v1383 = vadd.f32 0.0, %v1382
    %1384 = vdwg.mxu0
    %1385 = vmatprep.subr.mxu0 %v1051
    %1386 = vmatpush1.msra.mxu0 %v1050
    %1387 = vmatprep.subr.mxu0 %v1059
    %1388 = vmatpush1.msra.mxu0 %v1058
    %1389 = vmatprep.subr.mxu0 %v1067
    %1390 = vmatpush1.msra.mxu0 %v1066
    %1391 = vmatprep.subr.mxu0 %v1075
    %1392 = vmatpush1.msra.mxu0 %v1074
    %1393 = vmatprep.subr.mxu0 %v1083
    %1394 = vmatpush1.msra.mxu0 %v1082
    %1395 = vmatprep.subr.mxu0 %v1091
    %1396 = vmatpush1.msra.mxu0 %v1090
    %1397 = vmatprep.subr.mxu0 %v1099
    %1398 = vmatpush1.msra.mxu0 %v1098
    %1399 = vmatprep.subr.mxu0 %v1107
    %1400 = vmatpush1.msra.mxu0 %v1106
    %1401 = vmatprep.subr.mxu0 %v1115
    %1402 = vmatpush1.msra.mxu0 %v1114
    %1403 = vmatprep.subr.mxu0 %v1123
    %1404 = vmatpush1.msra.mxu0 %v1122
    %1405 = vmatprep.subr.mxu0 %v1131
    %1406 = vmatpush1.msra.mxu0 %v1130
    %1407 = vmatprep.subr.mxu0 %v1139
    %1408 = vmatpush1.msra.mxu0 %v1138
    %1409 = vmatprep.subr.mxu0 %v1147
    %1410 = vmatpush1.msra.mxu0 %v1146
    %1411 = vmatprep.subr.mxu0 %v1155
    %1412 = vmatpush1.msra.mxu0 %v1154
    %1413 = vmatprep.subr.mxu0 %v1163
    %1414 = vmatpush1.msra.mxu0 %v1162
    %1415 = vmatprep.subr.mxu0 %v1171
    %1416 = vmatpush1.msra.mxu0 %v1170
    %1417 = vmatprep.subr.mxu0 0.0
    %1418 = vmatpush1.msra.mxu0 0.0
    %1419 = vmatprep.subr.mxu0 0.0
    %1420 = vmatpush1.msra.mxu0 0.0
    %1421 = vmatprep.subr.mxu0 0.0
    %1422 = vmatpush1.msra.mxu0 0.0
    %1423 = vmatprep.subr.mxu0 0.0
    %1424 = vmatpush1.msra.mxu0 0.0
    %1425 = vmatprep.subr.mxu0 0.0
    %1426 = vmatpush1.msra.mxu0 0.0
    %1427 = vmatprep.subr.mxu0 0.0
    %1428 = vmatpush1.msra.mxu0 0.0
    %1429 = vmatprep.subr.mxu0 0.0
    %1430 = vmatpush1.msra.mxu0 0.0
    %1431 = vmatprep.subr.mxu0 0.0
    %1432 = vmatpush1.msra.mxu0 0.0
    %1433 = vmatprep.subr.mxu0 0.0
    %1434 = vmatpush1.msra.mxu0 0.0
    %1435 = vmatprep.subr.mxu0 0.0
    %1436 = vmatpush1.msra.mxu0 0.0
    %1437 = vmatprep.subr.mxu0 0.0
    %1438 = vmatpush1.msra.mxu0 0.0
    %1439 = vmatprep.subr.mxu0 0.0
    %1440 = vmatpush1.msra.mxu0 0.0
    %1441 = vmatprep.subr.mxu0 0.0
    %1442 = vmatpush1.msra.mxu0 0.0
    %1443 = vmatprep.subr.mxu0 0.0
    %1444 = vmatpush1.msra.mxu0 0.0
    %1445 = vmatprep.subr.mxu0 0.0
    %1446 = vmatpush1.msra.mxu0 0.0
    %1447 = vmatprep.subr.mxu0 0.0
    %1448 = vmatpush1.msra.mxu0 0.0
    %1449 = vmatprep.mubr.f32.mxu0 0.0
    %1450 = vmatmul.mubr.f32.gmra.mrb[0].mxu0 %v557
    %v1451 = vpop.f32.mrb[0].mxu0
    %v1452 = vadd.f32 0.0, %v1451
    %v1453 = vpop.f32.mrb[0].mxu0
    %v1454 = vadd.f32 0.0, %v1453
    %1455 = vdwg.mxu0
    %v1456 = vmul.f32 %v827, %v1239
    %v1457 = vmul.f32 %v829, %v1241
    %v1458 = vmul.f32 %v898, %v1310
    %v1459 = vmul.f32 %v900, %v1312
    %v1460 = vmul.f32 %v969, %v1381
    %v1461 = vmul.f32 %v971, %v1383
    %v1462 = vmul.f32 %v1040, %v1452
    %v1463 = vmul.f32 %v1042, %v1454
    %v1464 = vld [vmem:[#allocation13] sm:$0xff]
    %v1465 = vld [vmem:[#allocation13 + $0x8] sm:$0xff]
    %v1466 = vld [vmem:[#allocation13 + $0x10] sm:$0xff]
    %v1467 = vld [vmem:[#allocation13 + $0x18] sm:$0xff]
    %v1468 = vld [vmem:[#allocation13 + $0x20] sm:$0xff]
    %v1469 = vld [vmem:[#allocation13 + $0x28] sm:$0xff]
    %v1470 = vld [vmem:[#allocation13 + $0x30] sm:$0xff]
    %v1471 = vld [vmem:[#allocation13 + $0x38] sm:$0xff]
    %v1472 = vld [vmem:[#allocation13 + $0x40] sm:$0xff]
    %v1473 = vld [vmem:[#allocation13 + $0x48] sm:$0xff]
    %v1474 = vld [vmem:[#allocation13 + $0x50] sm:$0xff]
    %v1475 = vld [vmem:[#allocation13 + $0x58] sm:$0xff]
    %v1476 = vld [vmem:[#allocation13 + $0x60] sm:$0xff]
    %v1477 = vld [vmem:[#allocation13 + $0x68] sm:$0xff]
    %v1478 = vld [vmem:[#allocation13 + $0x70] sm:$0xff]
    %v1479 = vld [vmem:[#allocation13 + $0x78] sm:$0xff]
    %v1480 = vld [vmem:[#allocation13 + $0x80] sm:$0xff]
    %v1481 = vld [vmem:[#allocation13 + $0x88] sm:$0xff]
    %v1482 = vld [vmem:[#allocation13 + $0x90] sm:$0xff]
    %v1483 = vld [vmem:[#allocation13 + $0x98] sm:$0xff]
    %v1484 = vld [vmem:[#allocation13 + $0xa0] sm:$0xff]
    %v1485 = vld [vmem:[#allocation13 + $0xa8] sm:$0xff]
    %v1486 = vld [vmem:[#allocation13 + $0xb0] sm:$0xff]
    %v1487 = vld [vmem:[#allocation13 + $0xb8] sm:$0xff]
    %v1488 = vld [vmem:[#allocation13 + $0xc0] sm:$0xff]
    %v1489 = vld [vmem:[#allocation13 + $0xc8] sm:$0xff]
    %v1490 = vld [vmem:[#allocation13 + $0xd0] sm:$0xff]
    %v1491 = vld [vmem:[#allocation13 + $0xd8] sm:$0xff]
    %v1492 = vld [vmem:[#allocation13 + $0xe0] sm:$0xff]
    %v1493 = vld [vmem:[#allocation13 + $0xe8] sm:$0xff]
    %v1494 = vld [vmem:[#allocation13 + $0xf0] sm:$0xff]
    %v1495 = vld [vmem:[#allocation13 + $0xf8] sm:$0xff]
    %v1496 = vld [vmem:[#allocation13 + $0x100] sm:$0xff]
    %v1497 = vld [vmem:[#allocation13 + $0x108] sm:$0xff]
    %v1498 = vld [vmem:[#allocation13 + $0x110] sm:$0xff]
    %v1499 = vld [vmem:[#allocation13 + $0x118] sm:$0xff]
    %v1500 = vld [vmem:[#allocation13 + $0x120] sm:$0xff]
    %v1501 = vld [vmem:[#allocation13 + $0x128] sm:$0xff]
    %v1502 = vld [vmem:[#allocation13 + $0x130] sm:$0xff]
    %v1503 = vld [vmem:[#allocation13 + $0x138] sm:$0xff]
    %v1504 = vld [vmem:[#allocation13 + $0x140] sm:$0xff]
    %v1505 = vld [vmem:[#allocation13 + $0x148] sm:$0xff]
    %v1506 = vld [vmem:[#allocation13 + $0x150] sm:$0xff]
    %v1507 = vld [vmem:[#allocation13 + $0x158] sm:$0xff]
    %v1508 = vld [vmem:[#allocation13 + $0x160] sm:$0xff]
    %v1509 = vld [vmem:[#allocation13 + $0x168] sm:$0xff]
    %v1510 = vld [vmem:[#allocation13 + $0x170] sm:$0xff]
    %v1511 = vld [vmem:[#allocation13 + $0x178] sm:$0xff]
    %v1512 = vld [vmem:[#allocation13 + $0x180] sm:$0xff]
    %v1513 = vld [vmem:[#allocation13 + $0x188] sm:$0xff]
    %v1514 = vld [vmem:[#allocation13 + $0x190] sm:$0xff]
    %v1515 = vld [vmem:[#allocation13 + $0x198] sm:$0xff]
    %v1516 = vld [vmem:[#allocation13 + $0x1a0] sm:$0xff]
    %v1517 = vld [vmem:[#allocation13 + $0x1a8] sm:$0xff]
    %v1518 = vld [vmem:[#allocation13 + $0x1b0] sm:$0xff]
    %v1519 = vld [vmem:[#allocation13 + $0x1b8] sm:$0xff]
    %v1520 = vld [vmem:[#allocation13 + $0x1c0] sm:$0xff]
    %v1521 = vld [vmem:[#allocation13 + $0x1c8] sm:$0xff]
    %v1522 = vld [vmem:[#allocation13 + $0x1d0] sm:$0xff]
    %v1523 = vld [vmem:[#allocation13 + $0x1d8] sm:$0xff]
    %v1524 = vld [vmem:[#allocation13 + $0x1e0] sm:$0xff]
    %v1525 = vld [vmem:[#allocation13 + $0x1e8] sm:$0xff]
    %v1526 = vld [vmem:[#allocation13 + $0x1f0] sm:$0xff]
    %v1527 = vld [vmem:[#allocation13 + $0x1f8] sm:$0xff]
    %v1528 = vld [vmem:[#allocation13 + $0x200] sm:$0xff]
    %v1529 = vld [vmem:[#allocation13 + $0x208] sm:$0xff]
    %v1530 = vld [vmem:[#allocation13 + $0x210] sm:$0xff]
    %v1531 = vld [vmem:[#allocation13 + $0x218] sm:$0xff]
    %v1532 = vld [vmem:[#allocation13 + $0x220] sm:$0xff]
    %v1533 = vld [vmem:[#allocation13 + $0x228] sm:$0xff]
    %v1534 = vld [vmem:[#allocation13 + $0x230] sm:$0xff]
    %v1535 = vld [vmem:[#allocation13 + $0x238] sm:$0xff]
    %v1536 = vld [vmem:[#allocation13 + $0x240] sm:$0xff]
    %v1537 = vld [vmem:[#allocation13 + $0x248] sm:$0xff]
    %v1538 = vld [vmem:[#allocation13 + $0x250] sm:$0xff]
    %v1539 = vld [vmem:[#allocation13 + $0x258] sm:$0xff]
    %v1540 = vld [vmem:[#allocation13 + $0x260] sm:$0xff]
    %v1541 = vld [vmem:[#allocation13 + $0x268] sm:$0xff]
    %v1542 = vld [vmem:[#allocation13 + $0x270] sm:$0xff]
    %v1543 = vld [vmem:[#allocation13 + $0x278] sm:$0xff]
    %v1544 = vld [vmem:[#allocation13 + $0x280] sm:$0xff]
    %v1545 = vld [vmem:[#allocation13 + $0x288] sm:$0xff]
    %v1546 = vld [vmem:[#allocation13 + $0x290] sm:$0xff]
    %v1547 = vld [vmem:[#allocation13 + $0x298] sm:$0xff]
    %v1548 = vld [vmem:[#allocation13 + $0x2a0] sm:$0xff]
    %v1549 = vld [vmem:[#allocation13 + $0x2a8] sm:$0xff]
    %v1550 = vld [vmem:[#allocation13 + $0x2b0] sm:$0xff]
    %v1551 = vld [vmem:[#allocation13 + $0x2b8] sm:$0xff]
    %v1552 = vld [vmem:[#allocation13 + $0x2c0] sm:$0xff]
    %v1553 = vld [vmem:[#allocation13 + $0x2c8] sm:$0xff]
    %v1554 = vld [vmem:[#allocation13 + $0x2d0] sm:$0xff]
    %v1555 = vld [vmem:[#allocation13 + $0x2d8] sm:$0xff]
    %v1556 = vld [vmem:[#allocation13 + $0x2e0] sm:$0xff]
    %v1557 = vld [vmem:[#allocation13 + $0x2e8] sm:$0xff]
    %v1558 = vld [vmem:[#allocation13 + $0x2f0] sm:$0xff]
    %v1559 = vld [vmem:[#allocation13 + $0x2f8] sm:$0xff]
    %v1560 = vld [vmem:[#allocation13 + $0x300] sm:$0xff]
    %v1561 = vld [vmem:[#allocation13 + $0x308] sm:$0xff]
    %v1562 = vld [vmem:[#allocation13 + $0x310] sm:$0xff]
    %v1563 = vld [vmem:[#allocation13 + $0x318] sm:$0xff]
    %v1564 = vld [vmem:[#allocation13 + $0x320] sm:$0xff]
    %v1565 = vld [vmem:[#allocation13 + $0x328] sm:$0xff]
    %v1566 = vld [vmem:[#allocation13 + $0x330] sm:$0xff]
    %v1567 = vld [vmem:[#allocation13 + $0x338] sm:$0xff]
    %v1568 = vld [vmem:[#allocation13 + $0x340] sm:$0xff]
    %v1569 = vld [vmem:[#allocation13 + $0x348] sm:$0xff]
    %v1570 = vld [vmem:[#allocation13 + $0x350] sm:$0xff]
    %v1571 = vld [vmem:[#allocation13 + $0x358] sm:$0xff]
    %v1572 = vld [vmem:[#allocation13 + $0x360] sm:$0xff]
    %v1573 = vld [vmem:[#allocation13 + $0x368] sm:$0xff]
    %v1574 = vld [vmem:[#allocation13 + $0x370] sm:$0xff]
    %v1575 = vld [vmem:[#allocation13 + $0x378] sm:$0xff]
    %v1576 = vld [vmem:[#allocation13 + $0x380] sm:$0xff]
    %v1577 = vld [vmem:[#allocation13 + $0x388] sm:$0xff]
    %v1578 = vld [vmem:[#allocation13 + $0x390] sm:$0xff]
    %v1579 = vld [vmem:[#allocation13 + $0x398] sm:$0xff]
    %v1580 = vld [vmem:[#allocation13 + $0x3a0] sm:$0xff]
    %v1581 = vld [vmem:[#allocation13 + $0x3a8] sm:$0xff]
    %v1582 = vld [vmem:[#allocation13 + $0x3b0] sm:$0xff]
    %v1583 = vld [vmem:[#allocation13 + $0x3b8] sm:$0xff]
    %v1584 = vld [vmem:[#allocation13 + $0x3c0] sm:$0xff]
    %v1585 = vld [vmem:[#allocation13 + $0x3c8] sm:$0xff]
    %v1586 = vld [vmem:[#allocation13 + $0x3d0] sm:$0xff]
    %v1587 = vld [vmem:[#allocation13 + $0x3d8] sm:$0xff]
    %v1588 = vld [vmem:[#allocation13 + $0x3e0] sm:$0xff]
    %v1589 = vld [vmem:[#allocation13 + $0x3e8] sm:$0xff]
    %v1590 = vld [vmem:[#allocation13 + $0x3f0] sm:$0xff]
    %v1591 = vld [vmem:[#allocation13 + $0x3f8] sm:$0xff]
    %1592 = vmatprep.subr.mxu0 0.0
    %1593 = vmatpush1.msra.mxu0 %v1464
    %1594 = vmatprep.subr.mxu0 0.0
    %1595 = vmatpush1.msra.mxu0 %v1465
    %1596 = vmatprep.subr.mxu0 0.0
    %1597 = vmatpush1.msra.mxu0 %v1466
    %1598 = vmatprep.subr.mxu0 0.0
    %1599 = vmatpush1.msra.mxu0 %v1467
    %1600 = vmatprep.subr.mxu0 0.0
    %1601 = vmatpush1.msra.mxu0 %v1468
    %1602 = vmatprep.subr.mxu0 0.0
    %1603 = vmatpush1.msra.mxu0 %v1469
    %1604 = vmatprep.subr.mxu0 0.0
    %1605 = vmatpush1.msra.mxu0 %v1470
    %1606 = vmatprep.subr.mxu0 0.0
    %1607 = vmatpush1.msra.mxu0 %v1471
    %1608 = vmatprep.subr.mxu0 0.0
    %1609 = vmatpush1.msra.mxu0 %v1472
    %1610 = vmatprep.subr.mxu0 0.0
    %1611 = vmatpush1.msra.mxu0 %v1473
    %1612 = vmatprep.subr.mxu0 0.0
    %1613 = vmatpush1.msra.mxu0 %v1474
    %1614 = vmatprep.subr.mxu0 0.0
    %1615 = vmatpush1.msra.mxu0 %v1475
    %1616 = vmatprep.subr.mxu0 0.0
    %1617 = vmatpush1.msra.mxu0 %v1476
    %1618 = vmatprep.subr.mxu0 0.0
    %1619 = vmatpush1.msra.mxu0 %v1477
    %1620 = vmatprep.subr.mxu0 0.0
    %1621 = vmatpush1.msra.mxu0 %v1478
    %1622 = vmatprep.subr.mxu0 0.0
    %1623 = vmatpush1.msra.mxu0 %v1479
    %1624 = vmatprep.subr.mxu0 0.0
    %1625 = vmatpush1.msra.mxu0 %v1480
    %1626 = vmatprep.subr.mxu0 0.0
    %1627 = vmatpush1.msra.mxu0 %v1481
    %1628 = vmatprep.subr.mxu0 0.0
    %1629 = vmatpush1.msra.mxu0 %v1482
    %1630 = vmatprep.subr.mxu0 0.0
    %1631 = vmatpush1.msra.mxu0 %v1483
    %1632 = vmatprep.subr.mxu0 0.0
    %1633 = vmatpush1.msra.mxu0 %v1484
    %1634 = vmatprep.subr.mxu0 0.0
    %1635 = vmatpush1.msra.mxu0 %v1485
    %1636 = vmatprep.subr.mxu0 0.0
    %1637 = vmatpush1.msra.mxu0 %v1486
    %1638 = vmatprep.subr.mxu0 0.0
    %1639 = vmatpush1.msra.mxu0 %v1487
    %1640 = vmatprep.subr.mxu0 0.0
    %1641 = vmatpush1.msra.mxu0 %v1488
    %1642 = vmatprep.subr.mxu0 0.0
    %1643 = vmatpush1.msra.mxu0 %v1489
    %1644 = vmatprep.subr.mxu0 0.0
    %1645 = vmatpush1.msra.mxu0 %v1490
    %1646 = vmatprep.subr.mxu0 0.0
    %1647 = vmatpush1.msra.mxu0 %v1491
    %1648 = vmatprep.subr.mxu0 0.0
    %1649 = vmatpush1.msra.mxu0 %v1492
    %1650 = vmatprep.subr.mxu0 0.0
    %1651 = vmatpush1.msra.mxu0 %v1493
    %1652 = vmatprep.subr.mxu0 0.0
    %1653 = vmatpush1.msra.mxu0 %v1494
    %1654 = vmatprep.subr.mxu0 0.0
    %1655 = vmatpush1.msra.mxu0 %v1495
    %1656 = vmatprep.mubr.f32.mxu0 %v1457
    %1657 = vmatmul.mubr.f32.gmra.mrb[0].mxu0 %v1456
    %v1658 = vpop.f32.mrb[0].mxu0
    %v1659 = vadd.f32 0.0, %v1658
    %v1660 = vpop.f32.mrb[0].mxu0
    %1661 = vdwg.mxu0
    %1662 = vmatprep.subr.mxu0 0.0
    %1663 = vmatpush1.msra.mxu0 %v1496
    %1664 = vmatprep.subr.mxu0 0.0
    %1665 = vmatpush1.msra.mxu0 %v1497
    %1666 = vmatprep.subr.mxu0 0.0
    %1667 = vmatpush1.msra.mxu0 %v1498
    %1668 = vmatprep.subr.mxu0 0.0
    %1669 = vmatpush1.msra.mxu0 %v1499
    %1670 = vmatprep.subr.mxu0 0.0
    %1671 = vmatpush1.msra.mxu0 %v1500
    %1672 = vmatprep.subr.mxu0 0.0
    %1673 = vmatpush1.msra.mxu0 %v1501
    %1674 = vmatprep.subr.mxu0 0.0
    %1675 = vmatpush1.msra.mxu0 %v1502
    %1676 = vmatprep.subr.mxu0 0.0
    %1677 = vmatpush1.msra.mxu0 %v1503
    %1678 = vmatprep.subr.mxu0 0.0
    %1679 = vmatpush1.msra.mxu0 %v1504
    %1680 = vmatprep.subr.mxu0 0.0
    %1681 = vmatpush1.msra.mxu0 %v1505
    %1682 = vmatprep.subr.mxu0 0.0
    %1683 = vmatpush1.msra.mxu0 %v1506
    %1684 = vmatprep.subr.mxu0 0.0
    %1685 = vmatpush1.msra.mxu0 %v1507
    %1686 = vmatprep.subr.mxu0 0.0
    %1687 = vmatpush1.msra.mxu0 %v1508
    %1688 = vmatprep.subr.mxu0 0.0
    %1689 = vmatpush1.msra.mxu0 %v1509
    %1690 = vmatprep.subr.mxu0 0.0
    %1691 = vmatpush1.msra.mxu0 %v1510
    %1692 = vmatprep.subr.mxu0 0.0
    %1693 = vmatpush1.msra.mxu0 %v1511
    %1694 = vmatprep.subr.mxu0 0.0
    %1695 = vmatpush1.msra.mxu0 %v1512
    %1696 = vmatprep.subr.mxu0 0.0
    %1697 = vmatpush1.msra.mxu0 %v1513
    %1698 = vmatprep.subr.mxu0 0.0
    %1699 = vmatpush1.msra.mxu0 %v1514
    %1700 = vmatprep.subr.mxu0 0.0
    %1701 = vmatpush1.msra.mxu0 %v1515
    %1702 = vmatprep.subr.mxu0 0.0
    %1703 = vmatpush1.msra.mxu0 %v1516
    %1704 = vmatprep.subr.mxu0 0.0
    %1705 = vmatpush1.msra.mxu0 %v1517
    %1706 = vmatprep.subr.mxu0 0.0
    %1707 = vmatpush1.msra.mxu0 %v1518
    %1708 = vmatprep.subr.mxu0 0.0
    %1709 = vmatpush1.msra.mxu0 %v1519
    %1710 = vmatprep.subr.mxu0 0.0
    %1711 = vmatpush1.msra.mxu0 %v1520
    %1712 = vmatprep.subr.mxu0 0.0
    %1713 = vmatpush1.msra.mxu0 %v1521
    %1714 = vmatprep.subr.mxu0 0.0
    %1715 = vmatpush1.msra.mxu0 %v1522
    %1716 = vmatprep.subr.mxu0 0.0
    %1717 = vmatpush1.msra.mxu0 %v1523
    %1718 = vmatprep.subr.mxu0 0.0
    %1719 = vmatpush1.msra.mxu0 %v1524
    %1720 = vmatprep.subr.mxu0 0.0
    %1721 = vmatpush1.msra.mxu0 %v1525
    %1722 = vmatprep.subr.mxu0 0.0
    %1723 = vmatpush1.msra.mxu0 %v1526
    %1724 = vmatprep.subr.mxu0 0.0
    %1725 = vmatpush1.msra.mxu0 %v1527
    %1726 = vmatprep.mubr.f32.mxu0 %v1459
    %1727 = vmatmul.mubr.f32.gmra.mrb[0].mxu0 %v1458
    %v1728 = vpop.f32.mrb[0].mxu0
    %v1729 = vadd.f32 %v1659, %v1728
    %v1730 = vpop.f32.mrb[0].mxu0
    %1731 = vdwg.mxu0
    %1732 = vmatprep.subr.mxu0 0.0
    %1733 = vmatpush1.msra.mxu0 %v1528
    %1734 = vmatprep.subr.mxu0 0.0
    %1735 = vmatpush1.msra.mxu0 %v1529
    %1736 = vmatprep.subr.mxu0 0.0
    %1737 = vmatpush1.msra.mxu0 %v1530
    %1738 = vmatprep.subr.mxu0 0.0
    %1739 = vmatpush1.msra.mxu0 %v1531
    %1740 = vmatprep.subr.mxu0 0.0
    %1741 = vmatpush1.msra.mxu0 %v1532
    %1742 = vmatprep.subr.mxu0 0.0
    %1743 = vmatpush1.msra.mxu0 %v1533
    %1744 = vmatprep.subr.mxu0 0.0
    %1745 = vmatpush1.msra.mxu0 %v1534
    %1746 = vmatprep.subr.mxu0 0.0
    %1747 = vmatpush1.msra.mxu0 %v1535
    %1748 = vmatprep.subr.mxu0 0.0
    %1749 = vmatpush1.msra.mxu0 %v1536
    %1750 = vmatprep.subr.mxu0 0.0
    %1751 = vmatpush1.msra.mxu0 %v1537
    %1752 = vmatprep.subr.mxu0 0.0
    %1753 = vmatpush1.msra.mxu0 %v1538
    %1754 = vmatprep.subr.mxu0 0.0
    %1755 = vmatpush1.msra.mxu0 %v1539
    %1756 = vmatprep.subr.mxu0 0.0
    %1757 = vmatpush1.msra.mxu0 %v1540
    %1758 = vmatprep.subr.mxu0 0.0
    %1759 = vmatpush1.msra.mxu0 %v1541
    %1760 = vmatprep.subr.mxu0 0.0
    %1761 = vmatpush1.msra.mxu0 %v1542
    %1762 = vmatprep.subr.mxu0 0.0
    %1763 = vmatpush1.msra.mxu0 %v1543
    %1764 = vmatprep.subr.mxu0 0.0
    %1765 = vmatpush1.msra.mxu0 %v1544
    %1766 = vmatprep.subr.mxu0 0.0
    %1767 = vmatpush1.msra.mxu0 %v1545
    %1768 = vmatprep.subr.mxu0 0.0
    %1769 = vmatpush1.msra.mxu0 %v1546
    %1770 = vmatprep.subr.mxu0 0.0
    %1771 = vmatpush1.msra.mxu0 %v1547
    %1772 = vmatprep.subr.mxu0 0.0
    %1773 = vmatpush1.msra.mxu0 %v1548
    %1774 = vmatprep.subr.mxu0 0.0
    %1775 = vmatpush1.msra.mxu0 %v1549
    %1776 = vmatprep.subr.mxu0 0.0
    %1777 = vmatpush1.msra.mxu0 %v1550
    %1778 = vmatprep.subr.mxu0 0.0
    %1779 = vmatpush1.msra.mxu0 %v1551
    %1780 = vmatprep.subr.mxu0 0.0
    %1781 = vmatpush1.msra.mxu0 %v1552
    %1782 = vmatprep.subr.mxu0 0.0
    %1783 = vmatpush1.msra.mxu0 %v1553
    %1784 = vmatprep.subr.mxu0 0.0
    %1785 = vmatpush1.msra.mxu0 %v1554
    %1786 = vmatprep.subr.mxu0 0.0
    %1787 = vmatpush1.msra.mxu0 %v1555
    %1788 = vmatprep.subr.mxu0 0.0
    %1789 = vmatpush1.msra.mxu0 %v1556
    %1790 = vmatprep.subr.mxu0 0.0
    %1791 = vmatpush1.msra.mxu0 %v1557
    %1792 = vmatprep.subr.mxu0 0.0
    %1793 = vmatpush1.msra.mxu0 %v1558
    %1794 = vmatprep.subr.mxu0 0.0
    %1795 = vmatpush1.msra.mxu0 %v1559
    %1796 = vmatprep.mubr.f32.mxu0 %v1461
    %1797 = vmatmul.mubr.f32.gmra.mrb[0].mxu0 %v1460
    %v1798 = vpop.f32.mrb[0].mxu0
    %v1799 = vadd.f32 %v1729, %v1798
    %v1800 = vpop.f32.mrb[0].mxu0
    %1801 = vdwg.mxu0
    %1802 = vmatprep.subr.mxu0 0.0
    %1803 = vmatpush1.msra.mxu0 %v1560
    %1804 = vmatprep.subr.mxu0 0.0
    %1805 = vmatpush1.msra.mxu0 %v1561
    %1806 = vmatprep.subr.mxu0 0.0
    %1807 = vmatpush1.msra.mxu0 %v1562
    %1808 = vmatprep.subr.mxu0 0.0
    %1809 = vmatpush1.msra.mxu0 %v1563
    %1810 = vmatprep.subr.mxu0 0.0
    %1811 = vmatpush1.msra.mxu0 %v1564
    %1812 = vmatprep.subr.mxu0 0.0
    %1813 = vmatpush1.msra.mxu0 %v1565
    %1814 = vmatprep.subr.mxu0 0.0
    %1815 = vmatpush1.msra.mxu0 %v1566
    %1816 = vmatprep.subr.mxu0 0.0
    %1817 = vmatpush1.msra.mxu0 %v1567
    %1818 = vmatprep.subr.mxu0 0.0
    %1819 = vmatpush1.msra.mxu0 %v1568
    %1820 = vmatprep.subr.mxu0 0.0
    %1821 = vmatpush1.msra.mxu0 %v1569
    %1822 = vmatprep.subr.mxu0 0.0
    %1823 = vmatpush1.msra.mxu0 %v1570
    %1824 = vmatprep.subr.mxu0 0.0
    %1825 = vmatpush1.msra.mxu0 %v1571
    %1826 = vmatprep.subr.mxu0 0.0
    %1827 = vmatpush1.msra.mxu0 %v1572
    %1828 = vmatprep.subr.mxu0 0.0
    %1829 = vmatpush1.msra.mxu0 %v1573
    %1830 = vmatprep.subr.mxu0 0.0
    %1831 = vmatpush1.msra.mxu0 %v1574
    %1832 = vmatprep.subr.mxu0 0.0
    %1833 = vmatpush1.msra.mxu0 %v1575
    %1834 = vmatprep.subr.mxu0 0.0
    %1835 = vmatpush1.msra.mxu0 %v1576
    %1836 = vmatprep.subr.mxu0 0.0
    %1837 = vmatpush1.msra.mxu0 %v1577
    %1838 = vmatprep.subr.mxu0 0.0
    %1839 = vmatpush1.msra.mxu0 %v1578
    %1840 = vmatprep.subr.mxu0 0.0
    %1841 = vmatpush1.msra.mxu0 %v1579
    %1842 = vmatprep.subr.mxu0 0.0
    %1843 = vmatpush1.msra.mxu0 %v1580
    %1844 = vmatprep.subr.mxu0 0.0
    %1845 = vmatpush1.msra.mxu0 %v1581
    %1846 = vmatprep.subr.mxu0 0.0
    %1847 = vmatpush1.msra.mxu0 %v1582
    %1848 = vmatprep.subr.mxu0 0.0
    %1849 = vmatpush1.msra.mxu0 %v1583
    %1850 = vmatprep.subr.mxu0 0.0
    %1851 = vmatpush1.msra.mxu0 %v1584
    %1852 = vmatprep.subr.mxu0 0.0
    %1853 = vmatpush1.msra.mxu0 %v1585
    %1854 = vmatprep.subr.mxu0 0.0
    %1855 = vmatpush1.msra.mxu0 %v1586
    %1856 = vmatprep.subr.mxu0 0.0
    %1857 = vmatpush1.msra.mxu0 %v1587
    %1858 = vmatprep.subr.mxu0 0.0
    %1859 = vmatpush1.msra.mxu0 %v1588
    %1860 = vmatprep.subr.mxu0 0.0
    %1861 = vmatpush1.msra.mxu0 %v1589
    %1862 = vmatprep.subr.mxu0 0.0
    %1863 = vmatpush1.msra.mxu0 %v1590
    %1864 = vmatprep.subr.mxu0 0.0
    %1865 = vmatpush1.msra.mxu0 %v1591
    %1866 = vmatprep.mubr.f32.mxu0 %v1463
    %1867 = vmatmul.mubr.f32.gmra.mrb[0].mxu0 %v1462
    %v1868 = vpop.f32.mrb[0].mxu0
    %v1869 = vadd.f32 %v1799, %v1868
    %v1870 = vpop.f32.mrb[0].mxu0
    %1871 = vdwg.mxu0
    %v1872 = vxor.u32 %v1869, 2147483648
    %v1873 = vmul.f32 %v1872, 1.442695
    %v1874 = vpow.pop %v1873
    %v1875 = vadd.f32 %v1874, 1.0
    %v1876 = vrcp.pop %v1875
    %v1877 = vmul.f32 1.0, %v1876
    %v1878 = vld [vmem:[%s12] sm:$0x1]
    %v1879 = vsub.f32 1.0, %v1878
    %v1881 = vlaneseq
    %v1882 = vshrl.u32 %v1881, 7
    %v1883 = vsub.s32 0, %v1882
    %v1884 = vrot.slane %v1879, %v1883
    %v1886 = vmul.f32 %v1877, %v1884
    %v1888 = vlaneseq
    %v1889 = vshrl.u32 %v1888, 7
    %v1890 = vsub.s32 0, %v1889
    %v1891 = vrot.slane %v1878, %v1890
    %v1893 = vadd.f32 %v1886, %v1891
    %1894 = vst [vmem:[%s13 + $0x2] sm:$0x3] %v1893
    %vm1895 = vcmask 1041408
    %v1896 = vsel %vm1895, %v628, -inf
    %1897 = vmax.xlane.f32.xlu0 %v1896
    %v1898 = vpop.xlane.xlu0 %1897
    %v1899 = vsub.f32 %v628, %v1898
    %v1900 = vmul.f32 %v1899, 1.442695
    %v1901 = vpow.pop %v1900
    %v1902 = vsel %vm1895, %v1901, 0.0
    %1903 = vadd.xlane.f32.xlu0 %v1902
    %v1904 = vpop.xlane.xlu0 %1903
    %v1905 = vrcp.pop %v1904
    %v1906 = vmul.f32 %v1901, %v1905
    %1907 = vst [vmem:[%s13 + $0x4] sm:$0x3] %v1906
    // Predicated region
    $region86: #{decoder_mlp_forward.1} parent=1 // pred_check
      _
    $region87: #{decoder_mlp_forward.1} parent=1 // pred_check_branch
      %1909 = sbr.rel (0) target = $region89
    $region88: #{decoder_mlp_forward.1} parent=1 // pred_region
      _
    $region89: #{decoder_mlp_forward.1} parent=1 // pred_fallthru
      _
    // Predicated region
    $region90: #{decoder_mlp_forward.1} parent=1 // pred_check
      _
    $region91: #{decoder_mlp_forward.1} parent=1 // pred_check_branch
      %1911 = sbr.rel (0) target = $region93
    $region92: #{decoder_mlp_forward.1} parent=1 // pred_region
      _
    $region93: #{decoder_mlp_forward.1} parent=1 // pred_fallthru
      _
    %1912 = vsyncpa [#allocation3], 1
    %1913 = vsyncpa [#allocation5], 1
    %1914 = vsyncpa [#allocation8], 1
    %1915 = vsyncpa [#allocation11], 1
    %1916 = vsyncpa [#allocation14], 1

</llo_original>
